<compile_context>
chip_gen: v7x
topology: tpu7x:2x2x1
jax: 0.10.0
libtpu: 0.0.40
codegen_flags: <defaults>
</compile_context>

<pallas_src>
import functools

import jax
import jax.numpy as jnp
from jax import lax
from jax.experimental import pallas as pl
from jax.experimental.pallas import tpu as pltpu


def _fused_kernel(z_ref, w_ref, o_ref, *, n_layer, n_head, use_assoc):
    """Entire forward (all layers) for G batch elements.

    z_ref : (G, Np1, D)   pre-embedded activations
    w_ref : direct path : (n_layer, D, 2*H*D)  [Q_0|..|Q_{H-1} | P_0^T/N|..]
            assoc  path : (n_layer, 2*H*D, D)  [Q_0; ..; Q_{H-1}; P_0^T/N; ..]
    o_ref : (1, Np1, G*D) lane-packed output
    """
    G, Np1, D = z_ref.shape
    N = Np1 - 1
    H = n_head
    HD = H * D

    # keep[m] = 1. for m < N, 0. for the last token (== diag of the A matrix).
    keep = (lax.broadcasted_iota(jnp.int32, (Np1, 1), 0) < N).astype(jnp.float32)

    # NOTE: layer loops are static Python loops (n_layer is small); switch to
    # lax.fori_loop with dynamic w_ref[i] indexing if n_layer grows large.
    if use_assoc:
        # ---- linear-attention (associative) path, Np1 > D ----------------------
        #   residues = Z @ R,   R = sum_h Q_h (Z^T A Z) (P_h^T / N)
        zs = [z_ref[g] for g in range(G)]                        # each (Np1, D)
        for i in range(n_layer):
            Wl = w_ref[i]                                        # (2*H*D, D)
            wq = Wl[:HD]                                         # rows h*D+r = Q_h[r,:]
            wp3 = Wl[HD:].reshape(H, D, D)                       # wp3[h] = P_h^T / N
            new_zs = []
            for g in range(G):
                Zg = zs[g]
                # Gm = Zg^T @ (A Zg)  -- the only O(Np1) contraction, (D, D).
                Gm = lax.dot_general(Zg, Zg * keep,
                                     (((0,), (0,)), ((), ())),
                                     preferred_element_type=jnp.float32)
                # QG rows h*D+r = (Q_h @ Gm)[r, :]  (one (H*D, D) x (D, D) matmul).
                QG = jnp.dot(wq, Gm, preferred_element_type=jnp.float32)
                # R = sum_h (Q_h Gm) @ (P_h^T / N)
                Rh = lax.dot_general(QG.reshape(H, D, D), wp3,
                                     (((2,), (1,)), ((0,), (0,))),
                                     preferred_element_type=jnp.float32)
                R = jnp.sum(Rh, axis=0)                          # (D, D)
                new_zs.append(
                    Zg + jnp.dot(Zg, R, preferred_element_type=jnp.float32))
            zs = new_zs
        o_ref[0] = jnp.concatenate(zs, axis=1)                   # lane-packed store
    else:
        # ---- direct-attention path, Np1 <= D (short sequences) -----------------
        Zflat = z_ref[...].reshape(G * Np1, D)                   # stacked activations
        keep_flat = jnp.concatenate([keep] * G, axis=0)          # (G*Np1, 1)
        for i in range(n_layer):
            W = w_ref[i]                                         # (D, 2*H*D)
            # One lane-dense MXU push: every head's Z@Q_h and Z@P_h^T/N, all G
            # batch elements stacked along M.
            proj = jnp.dot(Zflat, W, preferred_element_type=jnp.float32)
            projP = proj[:, HD:] * keep_flat                     # A-mask applied once
            res_blocks = []
            for g in range(G):
                r0 = g * Np1
                Zg = Zflat[r0:r0 + Np1, :]
                res = jnp.zeros((Np1, D), jnp.float32)
                for h in range(H):
                    zq = proj[r0:r0 + Np1, h * D:(h + 1) * D]          # Z @ Q_h
                    kh = projP[r0:r0 + Np1, h * D:(h + 1) * D]         # A Z P_h^T / N
                    # attn = (Z Q_h) Z^T : contract last axes, no transpose.
                    attn = lax.dot_general(zq, Zg, (((1,), (1,)), ((), ())),
                                           preferred_element_type=jnp.float32)
                    res = res + jnp.dot(attn, kh,
                                        preferred_element_type=jnp.float32)
                res_blocks.append(res)
            Zflat = Zflat + jnp.concatenate(res_blocks, axis=0)
        o_ref[0] = jnp.concatenate(
            [Zflat[g * Np1:(g + 1) * Np1, :] for g in range(G)], axis=1)


@functools.partial(jax.jit,
                   static_argnames=("n_layer", "n_head", "hidden_dim",
                                    "num_blocks"))
def transformer_f_w_embed(Z, allparam, embed_w, embed_b, *, n_layer, n_head,
                          hidden_dim, num_blocks=None):
    """Forward pass matching Transformer_F_w_embed.forward (record_attn=False).

    Z        : (B, N+1, d+1) float32
    allparam : (n_layer, n_head, 2, D, D) with D = d+1+hidden_dim
    embed_w  : (hidden_dim, d+1)   (torch nn.Linear weight layout)
    embed_b  : (hidden_dim,)
    """
    B, Np1, d_in = Z.shape
    N = Np1 - 1
    D = d_in + hidden_dim
    H = n_head
    HD = H * D

    # --- embedding Linear + feature/placeholder concat hoisted to XLA ----------
    emb = jnp.einsum('bnj,hj->bnh', Z[:, :-1, :].astype(jnp.float32),
                     embed_w.astype(jnp.float32)) + embed_b.astype(jnp.float32)
    ph = jnp.ones((B, 1, hidden_dim), jnp.float32)
    Zc = jnp.concatenate(
        [Z.astype(jnp.float32), jnp.concatenate([emb, ph], axis=1)], axis=2)

    # --- grid: one block per TensorCore when possible (v7x has 2 TCs) ----------
    if num_blocks is None:
        num_blocks = 2 if (B % 2 == 0) else 1
    assert B % num_blocks == 0, "batch must divide evenly across grid blocks"
    G = B // num_blocks

    # --- packed, pre-scaled weights (1/N folded into P^T) ----------------------
    inv_n = jnp.float32(1.0 / N)
    Q = allparam[:, :, 1].astype(jnp.float32)                       # (L, H, D, D)
    Pt = jnp.swapaxes(allparam[:, :, 0], -1, -2).astype(jnp.float32) * inv_n

    use_assoc = Np1 > D   # linear-attention regime: fewer FLOPs, no (Np1,Np1) tmp
    if use_assoc:
        # Row-stacked: [Q_0; ..; Q_{H-1}; P_0^T/N; ..; P_{H-1}^T/N] -> (L, 2*H*D, D)
        W = jnp.concatenate([Q.reshape(n_layer, HD, D),
                             Pt.reshape(n_layer, HD, D)], axis=1)
    else:
        # Lane-packed: [Q_0|..|Q_{H-1} | P_0^T/N|..|P_{H-1}^T/N] -> (L, D, 2*H*D)
        Wq = jnp.transpose(Q, (0, 2, 1, 3)).reshape(n_layer, D, HD)
        Wp = jnp.transpose(Pt, (0, 2, 1, 3)).reshape(n_layer, D, HD)
        W = jnp.concatenate([Wq, Wp], axis=-1)

    kernel = functools.partial(_fused_kernel, n_layer=n_layer, n_head=n_head,
                               use_assoc=use_assoc)
    out = pl.pallas_call(
        kernel,
        out_shape=jax.ShapeDtypeStruct((num_blocks, Np1, G * D), jnp.float32),
        grid_spec=pltpu.PrefetchScalarGridSpec(
            num_scalar_prefetch=0,
            grid=(num_blocks,),
            in_specs=[
                pl.BlockSpec((G, Np1, D), lambda b: (b, 0, 0)),
                pl.BlockSpec(W.shape, lambda b: (0, 0, 0)),   # weights resident
            ],
            out_specs=pl.BlockSpec((1, Np1, G * D), lambda b: (b, 0, 0)),
        ),
        compiler_params=pltpu.CompilerParams(
            dimension_semantics=("parallel",)),   # batch axis shards across TCs
    )(Zc, W)

    # Unpack the lane-packed output: (num_blocks, Np1, G*D) -> (B, Np1, D).
    out = out.reshape(num_blocks, Np1, G, D)
    return jnp.transpose(out, (0, 2, 1, 3)).reshape(B, Np1, D)


def _reference(Z, allparam, embed_w, embed_b, *, n_layer, n_head, hidden_dim):
    """Pure-JAX reference mirroring the PyTorch code, for verification."""
    B = Z.shape[0]
    embedding = jnp.einsum('bnj,hj->bnh', Z[:, :-1, :], embed_w) + embed_b
    place_holder = jnp.ones((B, 1, hidden_dim), dtype=Z.dtype)
    embedding = jnp.concatenate((embedding, place_holder), axis=1)
    Zc = jnp.concatenate((Z, embedding), axis=2)
    Np1 = Zc.shape[1]
    N = Np1 - 1
    A = jnp.eye(Np1, dtype=jnp.float32).at[N, N].set(0.0)
    for i in range(n_layer):
        Zi = Zc
        residues = jnp.zeros_like(Zi)
        for j in range(n_head):
            P = allparam[i, j, 0]
            Q = allparam[i, j, 1]
            attn = jnp.einsum('BNi,ij,BMj->BNM', Zi, Q, Zi)
            key = jnp.einsum('ij,BNj->BNi', P, Zi)
            out = jnp.einsum('BNM,ML,BLi->BNi', attn, A, key) / N
            residues = residues + out
        Zc = Zi + residues
    return Zc


if __name__ == "__main__":
    # TODO(synk): record_attn=True (returning the per-layer/head attention dict)
    # is not implemented; only the default record_attn=False forward is covered.
    n_layer, n_head = 2, 2
    d = 7                    # d+1 = 8 raw features
    hidden_dim = 24          # D = d+1+hidden_dim = 32
    var = 0.02
    B = 4
    D_tot = d + 1 + hidden_dim

    root = jax.random.PRNGKey(0)
    # N = 15 -> Np1=16 <= D : direct-attention path (lane-packed weights)
    # N = 63 -> Np1=64 >  D : associative linear-attention path
    for case_idx, N in enumerate((15, 63)):
        key = jax.random.fold_in(root, case_idx)
        k_param, k_embw, k_embb, k_z = jax.random.split(key, 4)
        allparam = var * jax.random.normal(
            k_param, (n_layer, n_head, 2, D_tot, D_tot), dtype=jnp.float32)
        embed_w = 0.1 * jax.random.normal(k_embw, (hidden_dim, d + 1),
                                          dtype=jnp.float32)
        embed_b = 0.1 * jax.random.normal(k_embb, (hidden_dim,),
                                          dtype=jnp.float32)
        Z = jax.random.normal(k_z, (B, N + 1, d + 1), dtype=jnp.float32)

        out = transformer_f_w_embed(Z, allparam, embed_w, embed_b,
                                    n_layer=n_layer, n_head=n_head,
                                    hidden_dim=hidden_dim)
        out = jax.block_until_ready(out)
        ref = jax.block_until_ready(
            _reference(Z, allparam, embed_w, embed_b, n_layer=n_layer,
                       n_head=n_head, hidden_dim=hidden_dim))

        assert out.shape == (B, N + 1, D_tot)
        # Default MXU precision truncates f32 operands to bf16 per pass (in both
        # the kernel and the XLA reference) and the kernel uses a mathematically
        # equivalent but reassociated contraction order, so compare at 2e-3.
        # (Use precision=HIGHEST on all dots if strict torch-CPU parity is
        #  required.)
        err = float(jnp.max(jnp.abs(out - ref)))
        assert jnp.allclose(out, ref, atol=2e-3, rtol=2e-3), (
            f"mismatch vs reference for N={N}: max abs err {err}")
    print("KERNEL_OK")
</pallas_src>

<mosaic_0001>
module attributes {stable_mosaic.version = 11 : i64} {
  func.func @_fused_kernel(%arg0: i32, %arg1: memref<2x16x32xf32, #tpu.memory_space<vmem>>, %arg2: memref<2x32x128xf32, #tpu.memory_space<vmem>>, %arg3: memref<1x16x64xf32, #tpu.memory_space<vmem>>) attributes {dimension_semantics = [#tpu.dimension_semantics<parallel>], iteration_bounds = array<i64: 2>, scalar_prefetch = 0 : i64, scratch_operands = 0 : i64, tpu.core_type = #tpu.core_type<tc>, window_params = [{transform_indices = @transform_0, window_bounds = array<i64: 2, 16, 32>}, {pipeline_mode = #tpu.pipeline_mode<synchronous>, transform_indices = @transform_1, window_bounds = array<i64: 2, 32, 128>}, {transform_indices = @transform_2, window_bounds = array<i64: 1, 16, 64>}]} {
    %0 = tpu.iota {dimensions = array<i32: 0>} : vector<16x1xi32>
    %c15_i32 = arith.constant 15 : i32
    %1 = vector.broadcast %c15_i32 : i32 to vector<16x1xi32>
    %2 = arith.cmpi slt, %0, %1 : vector<16x1xi32>
    %3 = arith.extui %2 : vector<16x1xi1> to vector<16x1xi32>
    %4 = arith.sitofp %3 : vector<16x1xi32> to vector<16x1xf32>
    %c0 = arith.constant 0 : index
    %c0_0 = arith.constant 0 : index
    %c0_1 = arith.constant 0 : index
    %5 = vector.load %arg1[%c0, %c0_0, %c0_1] : memref<2x16x32xf32, #tpu.memory_space<vmem>>, vector<2x16x32xf32>
    %6 = vector.shape_cast %5 : vector<2x16x32xf32> to vector<32x32xf32>
    %7 = tpu.concatenate %4, %4 in 0 : vector<16x1xf32>, vector<16x1xf32> -> vector<32x1xf32>
    %c0_2 = arith.constant 0 : index
    %c0_3 = arith.constant 0 : index
    %c0_4 = arith.constant 0 : index
    %8 = vector.load %arg2[%c0_2, %c0_3, %c0_4] : memref<2x32x128xf32, #tpu.memory_space<vmem>>, vector<1x32x128xf32>
    %9 = vector.shape_cast %8 : vector<1x32x128xf32> to vector<32x128xf32>
    %cst = arith.constant dense<0.000000e+00> : vector<32x128xf32>
    %10 = tpu.matmul %6, %9, %cst {dimension_numbers = #tpu.dot_dimension_numbers<[1], [0], [0], [1], [0, 0, 1, 1], [], []>} : vector<32x32xf32>, vector<32x128xf32>, vector<32x128xf32> -> vector<32x128xf32>
    %11 = vector.extract_strided_slice %10 {offsets = [0, 64], sizes = [32, 64], strides = [1, 1]} : vector<32x128xf32> to vector<32x64xf32>
    %12 = vector.broadcast %7 : vector<32x1xf32> to vector<32x64xf32>
    %13 = arith.mulf %11, %12 : vector<32x64xf32>
    %14 = vector.extract_strided_slice %6 {offsets = [0, 0], sizes = [16, 32], strides = [1, 1]} : vector<32x32xf32> to vector<16x32xf32>
    %cst_5 = arith.constant 0.000000e+00 : f32
    %15 = vector.broadcast %cst_5 : f32 to vector<16x32xf32>
    %16 = vector.extract_strided_slice %10 {offsets = [0, 0], sizes = [16, 32], strides = [1, 1]} : vector<32x128xf32> to vector<16x32xf32>
    %17 = vector.extract_strided_slice %13 {offsets = [0, 0], sizes = [16, 32], strides = [1, 1]} : vector<32x64xf32> to vector<16x32xf32>
    %cst_6 = arith.constant dense<0.000000e+00> : vector<16x16xf32>
    %18 = tpu.matmul %16, %14, %cst_6 {dimension_numbers = #tpu.dot_dimension_numbers<[1], [1], [0], [0], [0, 0, 1, 0], [], []>} : vector<16x32xf32>, vector<16x32xf32>, vector<16x16xf32> -> vector<16x16xf32>
    %cst_7 = arith.constant dense<0.000000e+00> : vector<16x32xf32>
    %19 = tpu.matmul %18, %17, %cst_7 {dimension_numbers = #tpu.dot_dimension_numbers<[1], [0], [0], [1], [0, 0, 1, 1], [], []>} : vector<16x16xf32>, vector<16x32xf32>, vector<16x32xf32> -> vector<16x32xf32>
    %20 = arith.addf %15, %19 : vector<16x32xf32>
    %21 = vector.extract_strided_slice %10 {offsets = [0, 32], sizes = [16, 32], strides = [1, 1]} : vector<32x128xf32> to vector<16x32xf32>
    %22 = vector.extract_strided_slice %13 {offsets = [0, 32], sizes = [16, 32], strides = [1, 1]} : vector<32x64xf32> to vector<16x32xf32>
    %cst_8 = arith.constant dense<0.000000e+00> : vector<16x16xf32>
    %23 = tpu.matmul %21, %14, %cst_8 {dimension_numbers = #tpu.dot_dimension_numbers<[1], [1], [0], [0], [0, 0, 1, 0], [], []>} : vector<16x32xf32>, vector<16x32xf32>, vector<16x16xf32> -> vector<16x16xf32>
    %cst_9 = arith.constant dense<0.000000e+00> : vector<16x32xf32>
    %24 = tpu.matmul %23, %22, %cst_9 {dimension_numbers = #tpu.dot_dimension_numbers<[1], [0], [0], [1], [0, 0, 1, 1], [], []>} : vector<16x16xf32>, vector<16x32xf32>, vector<16x32xf32> -> vector<16x32xf32>
    %25 = arith.addf %20, %24 : vector<16x32xf32>
    %26 = vector.extract_strided_slice %6 {offsets = [16, 0], sizes = [16, 32], strides = [1, 1]} : vector<32x32xf32> to vector<16x32xf32>
    %cst_10 = arith.constant 0.000000e+00 : f32
    %27 = vector.broadcast %cst_10 : f32 to vector<16x32xf32>
    %28 = vector.extract_strided_slice %10 {offsets = [16, 0], sizes = [16, 32], strides = [1, 1]} : vector<32x128xf32> to vector<16x32xf32>
    %29 = vector.extract_strided_slice %13 {offsets = [16, 0], sizes = [16, 32], strides = [1, 1]} : vector<32x64xf32> to vector<16x32xf32>
    %cst_11 = arith.constant dense<0.000000e+00> : vector<16x16xf32>
    %30 = tpu.matmul %28, %26, %cst_11 {dimension_numbers = #tpu.dot_dimension_numbers<[1], [1], [0], [0], [0, 0, 1, 0], [], []>} : vector<16x32xf32>, vector<16x32xf32>, vector<16x16xf32> -> vector<16x16xf32>
    %cst_12 = arith.constant dense<0.000000e+00> : vector<16x32xf32>
    %31 = tpu.matmul %30, %29, %cst_12 {dimension_numbers = #tpu.dot_dimension_numbers<[1], [0], [0], [1], [0, 0, 1, 1], [], []>} : vector<16x16xf32>, vector<16x32xf32>, vector<16x32xf32> -> vector<16x32xf32>
    %32 = arith.addf %27, %31 : vector<16x32xf32>
    %33 = vector.extract_strided_slice %10 {offsets = [16, 32], sizes = [16, 32], strides = [1, 1]} : vector<32x128xf32> to vector<16x32xf32>
    %34 = vector.extract_strided_slice %13 {offsets = [16, 32], sizes = [16, 32], strides = [1, 1]} : vector<32x64xf32> to vector<16x32xf32>
    %cst_13 = arith.constant dense<0.000000e+00> : vector<16x16xf32>
    %35 = tpu.matmul %33, %26, %cst_13 {dimension_numbers = #tpu.dot_dimension_numbers<[1], [1], [0], [0], [0, 0, 1, 0], [], []>} : vector<16x32xf32>, vector<16x32xf32>, vector<16x16xf32> -> vector<16x16xf32>
    %cst_14 = arith.constant dense<0.000000e+00> : vector<16x32xf32>
    %36 = tpu.matmul %35, %34, %cst_14 {dimension_numbers = #tpu.dot_dimension_numbers<[1], [0], [0], [1], [0, 0, 1, 1], [], []>} : vector<16x16xf32>, vector<16x32xf32>, vector<16x32xf32> -> vector<16x32xf32>
    %37 = arith.addf %32, %36 : vector<16x32xf32>
    %38 = tpu.concatenate %25, %37 in 0 : vector<16x32xf32>, vector<16x32xf32> -> vector<32x32xf32>
    %39 = arith.addf %6, %38 : vector<32x32xf32>
    %c1 = arith.constant 1 : index
    %c0_15 = arith.constant 0 : index
    %c0_16 = arith.constant 0 : index
    %40 = vector.load %arg2[%c1, %c0_15, %c0_16] : memref<2x32x128xf32, #tpu.memory_space<vmem>>, vector<1x32x128xf32>
    %41 = vector.shape_cast %40 : vector<1x32x128xf32> to vector<32x128xf32>
    %cst_17 = arith.constant dense<0.000000e+00> : vector<32x128xf32>
    %42 = tpu.matmul %39, %41, %cst_17 {dimension_numbers = #tpu.dot_dimension_numbers<[1], [0], [0], [1], [0, 0, 1, 1], [], []>} : vector<32x32xf32>, vector<32x128xf32>, vector<32x128xf32> -> vector<32x128xf32>
    %43 = vector.extract_strided_slice %42 {offsets = [0, 64], sizes = [32, 64], strides = [1, 1]} : vector<32x128xf32> to vector<32x64xf32>
    %44 = vector.broadcast %7 : vector<32x1xf32> to vector<32x64xf32>
    %45 = arith.mulf %43, %44 : vector<32x64xf32>
    %46 = vector.extract_strided_slice %39 {offsets = [0, 0], sizes = [16, 32], strides = [1, 1]} : vector<32x32xf32> to vector<16x32xf32>
    %cst_18 = arith.constant 0.000000e+00 : f32
    %47 = vector.broadcast %cst_18 : f32 to vector<16x32xf32>
    %48 = vector.extract_strided_slice %42 {offsets = [0, 0], sizes = [16, 32], strides = [1, 1]} : vector<32x128xf32> to vector<16x32xf32>
    %49 = vector.extract_strided_slice %45 {offsets = [0, 0], sizes = [16, 32], strides = [1, 1]} : vector<32x64xf32> to vector<16x32xf32>
    %cst_19 = arith.constant dense<0.000000e+00> : vector<16x16xf32>
    %50 = tpu.matmul %48, %46, %cst_19 {dimension_numbers = #tpu.dot_dimension_numbers<[1], [1], [0], [0], [0, 0, 1, 0], [], []>} : vector<16x32xf32>, vector<16x32xf32>, vector<16x16xf32> -> vector<16x16xf32>
    %cst_20 = arith.constant dense<0.000000e+00> : vector<16x32xf32>
    %51 = tpu.matmul %50, %49, %cst_20 {dimension_numbers = #tpu.dot_dimension_numbers<[1], [0], [0], [1], [0, 0, 1, 1], [], []>} : vector<16x16xf32>, vector<16x32xf32>, vector<16x32xf32> -> vector<16x32xf32>
    %52 = arith.addf %47, %51 : vector<16x32xf32>
    %53 = vector.extract_strided_slice %42 {offsets = [0, 32], sizes = [16, 32], strides = [1, 1]} : vector<32x128xf32> to vector<16x32xf32>
    %54 = vector.extract_strided_slice %45 {offsets = [0, 32], sizes = [16, 32], strides = [1, 1]} : vector<32x64xf32> to vector<16x32xf32>
    %cst_21 = arith.constant dense<0.000000e+00> : vector<16x16xf32>
    %55 = tpu.matmul %53, %46, %cst_21 {dimension_numbers = #tpu.dot_dimension_numbers<[1], [1], [0], [0], [0, 0, 1, 0], [], []>} : vector<16x32xf32>, vector<16x32xf32>, vector<16x16xf32> -> vector<16x16xf32>
    %cst_22 = arith.constant dense<0.000000e+00> : vector<16x32xf32>
    %56 = tpu.matmul %55, %54, %cst_22 {dimension_numbers = #tpu.dot_dimension_numbers<[1], [0], [0], [1], [0, 0, 1, 1], [], []>} : vector<16x16xf32>, vector<16x32xf32>, vector<16x32xf32> -> vector<16x32xf32>
    %57 = arith.addf %52, %56 : vector<16x32xf32>
    %58 = vector.extract_strided_slice %39 {offsets = [16, 0], sizes = [16, 32], strides = [1, 1]} : vector<32x32xf32> to vector<16x32xf32>
    %cst_23 = arith.constant 0.000000e+00 : f32
    %59 = vector.broadcast %cst_23 : f32 to vector<16x32xf32>
    %60 = vector.extract_strided_slice %42 {offsets = [16, 0], sizes = [16, 32], strides = [1, 1]} : vector<32x128xf32> to vector<16x32xf32>
    %61 = vector.extract_strided_slice %45 {offsets = [16, 0], sizes = [16, 32], strides = [1, 1]} : vector<32x64xf32> to vector<16x32xf32>
    %cst_24 = arith.constant dense<0.000000e+00> : vector<16x16xf32>
    %62 = tpu.matmul %60, %58, %cst_24 {dimension_numbers = #tpu.dot_dimension_numbers<[1], [1], [0], [0], [0, 0, 1, 0], [], []>} : vector<16x32xf32>, vector<16x32xf32>, vector<16x16xf32> -> vector<16x16xf32>
    %cst_25 = arith.constant dense<0.000000e+00> : vector<16x32xf32>
    %63 = tpu.matmul %62, %61, %cst_25 {dimension_numbers = #tpu.dot_dimension_numbers<[1], [0], [0], [1], [0, 0, 1, 1], [], []>} : vector<16x16xf32>, vector<16x32xf32>, vector<16x32xf32> -> vector<16x32xf32>
    %64 = arith.addf %59, %63 : vector<16x32xf32>
    %65 = vector.extract_strided_slice %42 {offsets = [16, 32], sizes = [16, 32], strides = [1, 1]} : vector<32x128xf32> to vector<16x32xf32>
    %66 = vector.extract_strided_slice %45 {offsets = [16, 32], sizes = [16, 32], strides = [1, 1]} : vector<32x64xf32> to vector<16x32xf32>
    %cst_26 = arith.constant dense<0.000000e+00> : vector<16x16xf32>
    %67 = tpu.matmul %65, %58, %cst_26 {dimension_numbers = #tpu.dot_dimension_numbers<[1], [1], [0], [0], [0, 0, 1, 0], [], []>} : vector<16x32xf32>, vector<16x32xf32>, vector<16x16xf32> -> vector<16x16xf32>
    %cst_27 = arith.constant dense<0.000000e+00> : vector<16x32xf32>
    %68 = tpu.matmul %67, %66, %cst_27 {dimension_numbers = #tpu.dot_dimension_numbers<[1], [0], [0], [1], [0, 0, 1, 1], [], []>} : vector<16x16xf32>, vector<16x32xf32>, vector<16x32xf32> -> vector<16x32xf32>
    %69 = arith.addf %64, %68 : vector<16x32xf32>
    %70 = tpu.concatenate %57, %69 in 0 : vector<16x32xf32>, vector<16x32xf32> -> vector<32x32xf32>
    %71 = arith.addf %39, %70 : vector<32x32xf32>
    %72 = vector.extract_strided_slice %71 {offsets = [0, 0], sizes = [16, 32], strides = [1, 1]} : vector<32x32xf32> to vector<16x32xf32>
    %73 = vector.extract_strided_slice %71 {offsets = [16, 0], sizes = [16, 32], strides = [1, 1]} : vector<32x32xf32> to vector<16x32xf32>
    %74 = tpu.concatenate %72, %73 in 1 : vector<16x32xf32>, vector<16x32xf32> -> vector<16x64xf32>
    %c0_28 = arith.constant 0 : index
    %c0_29 = arith.constant 0 : index
    %c0_30 = arith.constant 0 : index
    %75 = vector.load %arg3[%c0_28, %c0_29, %c0_30] : memref<1x16x64xf32, #tpu.memory_space<vmem>>, vector<1x16x64xf32>
    %76 = vector.shape_cast %75 : vector<1x16x64xf32> to vector<16x64xf32>
    %77 = vector.shape_cast %74 : vector<16x64xf32> to vector<1x16x64xf32>
    tpu.vector_store %arg3[%c0_28, %c0_29, %c0_30], %77 {strides = array<i32>} : memref<1x16x64xf32, #tpu.memory_space<vmem>>, vector<1x16x64xf32>,
    return
  }
  func.func @transform_0(%arg0: i32) -> (i32, i32, i32) {
    %c0_i32 = arith.constant 0 : i32
    %c0_i32_0 = arith.constant 0 : i32
    %c0_i32_1 = arith.constant 0 : i32
    return %arg0, %c0_i32, %c0_i32_0 : i32, i32, i32
  }
  func.func @transform_1(%arg0: i32) -> (i32, i32, i32) {
    %c0_i32 = arith.constant 0 : i32
    %c0_i32_0 = arith.constant 0 : i32
    %c0_i32_1 = arith.constant 0 : i32
    %c0_i32_2 = arith.constant 0 : i32
    return %c0_i32, %c0_i32_0, %c0_i32_1 : i32, i32, i32
  }
  func.func @transform_2(%arg0: i32) -> (i32, i32, i32) {
    %c0_i32 = arith.constant 0 : i32
    %c0_i32_0 = arith.constant 0 : i32
    %c0_i32_1 = arith.constant 0 : i32
    return %arg0, %c0_i32, %c0_i32_0 : i32, i32, i32
  }
}

</mosaic_0001>

<llo_original>
// kernel: transformer_f_w_embed.1
$region0: #{transformer_f_w_embed.1}
  #allocation0 [shape = 'u32[]', space=smem, size = 0x4, offset = 0x4, fixed_abs, tag = 'smem constant byte address 0x4 - core index']
  #allocation1 [shape = 'u32[144,128]{1,0:T(1,128)}', space=vmem, size = 0x12000, scoped, tag = 'internal scratch']
  %s0 = inlined_call_operand.vmem [shape: f32[4,16,32], index: 0, kind: input, shape index: {}]
  %s1 = inlined_call_operand.vmem [shape: f32[2,32,128], index: 1, kind: input, shape index: {}]
  %s2 = inlined_call_operand.vmem [shape: f32[2,16,64], index: 2, kind: output, shape index: {}]
  %s3 = sld [smem:[#allocation0]]
  $region41: #{transformer_f_w_embed.1} parent=0
    _
  %s5 = ssub.s32 1, %s3
  %s6 = scalar_select 0, %s5, %s3
  loop: start=0, step=1, limit=4
  $region2: #{transformer_f_w_embed.1} parent=0 // loop_pre_header
    _
  $region3: #{transformer_f_w_embed.1} parent=0 // loop_header
    %s8 = sphi 0, %s12
    %p9 = scmp.ge.s32.totalorder %s8, 4
    %s18 = sphi 0, %s20
    %s21 = sphi 0, %s18
    %s22 = sphi 0, %s21
    %s38 = sphi 0, %s22
    %s42 = sphi 0, %s42
    %s44 = sphi 0, %s42
    %s45 = sphi 0, %s44
    %s59 = sphi 0, %s45
    %s65 = sphi 0, %s67
    %s68 = sphi 0, %s65
    %s69 = sphi 0, %s68
    %s85 = sphi 0, %s69
  $region4: #{transformer_f_w_embed.1} parent=0 // loop_header_branch
    %11 = sbr.rel (%p9) target = $region8
  $region5: #{transformer_f_w_embed.1} parent=0 // loop_body
    %s13 = ssub.s32 %s8, 1
    %s14 = ssub.s32 %s8, 2
    %s15 = sadd.s32 %s8, 1
    %s16 = ssub.s32 %s8, %s15
    %p17 = scmp.eq.s32.totalorder %s16, 0
    %s19 = sadd.s32 %s18, 1
    %s20 = scalar_select %p17, %s18, %s19
    %p23 = pneg %p17
    %p24 = scmp.eq.s32.totalorder %s8, 1
    %p25 = por %p23, %p24
    %p26 = scmp.ne.s32.totalorder %s18, %s21
    %p27 = scmp.eq.s32.totalorder %s8, 0
    %p28 = por %p26, %p27
    %p29 = scmp.ne.s32.totalorder %s18, %s21
    %p30 = scmp.eq.s32.totalorder %s13, 1
    %p31 = por %p29, %p30
    %p32 = scmp.ne.s32.totalorder %s21, %s22
    %p33 = scmp.eq.s32.totalorder %s13, 0
    %p34 = por %p32, %p33
    %p35 = scmp.ne.s32.totalorder %s21, %s22
    %p36 = scmp.eq.s32.totalorder %s14, 1
    %p37 = por %p35, %p36
    %p39 = scmp.ne.s32.totalorder %s22, %s38
    %p40 = scmp.eq.s32.totalorder %s14, 0
    %p41 = por %p39, %p40
    %s43 = sadd.s32 %s42, 1
    %p46 = scmp.eq.s32.totalorder %s8, 1
    %p47 = scmp.ne.s32.totalorder %s42, %s44
    %p48 = scmp.eq.s32.totalorder %s8, 0
    %p49 = por %p47, %p48
    %p50 = scmp.ne.s32.totalorder %s42, %s44
    %p51 = scmp.eq.s32.totalorder %s13, 1
    %p52 = por %p50, %p51
    %p53 = scmp.ne.s32.totalorder %s44, %s45
    %p54 = scmp.eq.s32.totalorder %s13, 0
    %p55 = por %p53, %p54
    %p56 = scmp.ne.s32.totalorder %s44, %s45
    %p57 = scmp.eq.s32.totalorder %s14, 1
    %p58 = por %p56, %p57
    %p60 = scmp.ne.s32.totalorder %s45, %s59
    %p61 = scmp.eq.s32.totalorder %s14, 0
    %p62 = por %p60, %p61
    %s63 = ssub.s32 %s8, %s15
    %p64 = scmp.eq.s32.totalorder %s63, 0
    %s66 = sadd.s32 %s65, 1
    %s67 = scalar_select %p64, %s65, %s66
    %p70 = pneg %p64
    %p71 = scmp.eq.s32.totalorder %s8, 1
    %p72 = por %p70, %p71
    %p73 = scmp.ne.s32.totalorder %s65, %s68
    %p74 = scmp.eq.s32.totalorder %s8, 0
    %p75 = por %p73, %p74
    %p76 = scmp.ne.s32.totalorder %s65, %s68
    %p77 = scmp.eq.s32.totalorder %s13, 1
    %p78 = por %p76, %p77
    %p79 = scmp.ne.s32.totalorder %s68, %s69
    %p80 = scmp.eq.s32.totalorder %s13, 0
    %p81 = por %p79, %p80
    %p82 = scmp.ne.s32.totalorder %s68, %s69
    %p83 = scmp.eq.s32.totalorder %s14, 1
    %p84 = por %p82, %p83
    %p86 = scmp.ne.s32.totalorder %s69, %s85
    %p87 = scmp.eq.s32.totalorder %s14, 0
    %p88 = por %p86, %p87
    %p89 = scmp.le.s32.totalorder 1, %s8
    %p90 = scmp.lt.s32.totalorder %s8, 3
    %p91 = pnand %p89, %p90
    %p92 = pneg %p91
    // Predicated region
    $region9: #{transformer_f_w_embed.1} parent=5 // pred_check
      _
    $region10: #{transformer_f_w_embed.1} parent=5 // pred_check_branch
      %94 = sbr.rel (%p91) target = $region12
    $region11: #{transformer_f_w_embed.1} parent=5 // pred_region
      %s95 = ssub.s32 %s8, 1
      // Predicated region
      $region13: #{transformer_f_w_embed.1} parent=11 // pred_check
        %p96 = pneg %p55
      $region14: #{transformer_f_w_embed.1} parent=11 // pred_check_branch
        %98 = sbr.rel (%p96) target = $region16
      $region15: #{transformer_f_w_embed.1} parent=11 // pred_region
        _
      $region16: #{transformer_f_w_embed.1} parent=11 // pred_fallthru
        _
    $region12: #{transformer_f_w_embed.1} parent=5 // pred_fallthru
      _
    %p99 = scmp.lt.s32.totalorder %s8, 2
    // Predicated region
    $region17: #{transformer_f_w_embed.1} parent=5 // pred_check
      %p100 = pneg %p99
    $region18: #{transformer_f_w_embed.1} parent=5 // pred_check_branch
      %102 = sbr.rel (%p100) target = $region20
    $region19: #{transformer_f_w_embed.1} parent=5 // pred_region
      // Predicated region
      $region21: #{transformer_f_w_embed.1} parent=19 // pred_check
        %p103 = pneg %p28
      $region22: #{transformer_f_w_embed.1} parent=19 // pred_check_branch
        %105 = sbr.rel (%p103) target = $region24
      $region23: #{transformer_f_w_embed.1} parent=19 // pred_region
        %s106 = smul.u32 2, %s8
        %p107 = scmp.lt.s32.totalorder %s106, 3
        %s108 = scalar_select %p107, %s106, 3
        %s109 = smul.addr %s108, 2
        %s110 = smul.addr %s109, 8
        %s111 = scalar_lea.vmem %s0, %s110
        %s112 = smul.u32 2, %s8
      $region24: #{transformer_f_w_embed.1} parent=19 // pred_fallthru
        _
    $region20: #{transformer_f_w_embed.1} parent=5 // pred_fallthru
      _
    %p113 = scmp.le.s32.totalorder 1, %s8
    %p114 = scmp.lt.s32.totalorder %s8, 3
    %p115 = pnand %p113, %p114
    %p116 = pneg %p115
    // Predicated region
    $region25: #{transformer_f_w_embed.1} parent=5 // pred_check
      _
    $region26: #{transformer_f_w_embed.1} parent=5 // pred_check_branch
      %118 = sbr.rel (%p115) target = $region28
    $region27: #{transformer_f_w_embed.1} parent=5 // pred_region
      %s119 = ssub.s32 %s8, 1
      %s120 = smul.u32 2, %s13
      %p121 = scmp.lt.s32.totalorder %s120, 3
      %s122 = scalar_select %p121, %s120, 3
      %s123 = smul.addr %s122, 2
      %s124 = smul.addr %s123, 8
      %s125 = scalar_lea.vmem %s0, %s124
      %p126 = pneg %p34
      %p127 = pneg %p31
      %p128 = pneg %p55
      %p129 = pneg %p52
      %p130 = pneg %p81
      %p131 = pneg %p78
      %p132 = scmp.lt.s32.totalorder %s13, 1
      %s133 = scalar_select %p132, %s13, 1
      %s134 = smul.addr %s133, 2
      %s135 = smul.addr %s134, 8
      %s136 = scalar_lea.vmem %s2, %s135
      %s137 = smul.u32 2, %s13
      %p138 = scmp.lt.s32.totalorder %s137, 3
      %s139 = scalar_select %p138, %s137, 3
      %s140 = smul.addr %s139, 2
      %s141 = smul.addr %s140, 8
      %s142 = scalar_lea.vmem %s0, %s141
      %s143 = smul.u32 2, %s13
      %p144 = scmp.lt.s32.totalorder %s13, 1
      %s145 = scalar_select %p144, %s13, 1
      %s146 = smul.addr %s145, 2
      %s147 = smul.addr %s146, 8
      %s148 = scalar_lea.vmem %s2, %s147
      %v149 = vlaneseq
      %v150 = vshrl.u32 %v149, 7
      %v151 = vadd.s32 %v150, 8
      %vm152 = vcmp.lt.s32.totalorder %v150, 15
      %vm153 = vcmp.lt.s32.totalorder %v151, 15
      %v154 = vsel %vm152, 1, 0
      %v155 = vsel %vm153, 1, 0
      %v156 = vcvt.s32.f32 %v154
      %v157 = vcvt.s32.f32 %v155
      %v158 = vld [vmem:[%s142] sm:$0xff]
      %v159 = vld [vmem:[%s142 + $0x8] sm:$0xff]
      %v160 = vld [vmem:[%s142 + $0x10] sm:$0xff]
      %v161 = vld [vmem:[%s142 + $0x18] sm:$0xff]
      %v162 = vld [vmem:[%s1] sm:$0xff]
      %v163 = vld [vmem:[%s1 + $0x8] sm:$0xff]
      %v164 = vld [vmem:[%s1 + $0x10] sm:$0xff]
      %v165 = vld [vmem:[%s1 + $0x18] sm:$0xff]
      %vm166 = vcmask 261120
      %v168 = vsel %vm166, %v158, 0
      %v171 = vsel %vm166, %v159, 0
      %v174 = vsel %vm166, %v160, 0
      %v177 = vsel %vm166, %v161, 0
      %179 = vmatprep.subr.mxu0 0.0
      %180 = vmatpush1.msra.mxu0 %v162
      %181 = vmatprep.subr.mxu0 0.0
      %182 = vmatpush1.msra.mxu0 %v163
      %183 = vmatprep.subr.mxu0 0.0
      %184 = vmatpush1.msra.mxu0 %v164
      %185 = vmatprep.subr.mxu0 0.0
      %186 = vmatpush1.msra.mxu0 %v165
      %187 = vmatprep.subr.mxu0 0.0
      %188 = vmatpush1.msra.mxu0 0.0
      %189 = vmatprep.subr.mxu0 0.0
      %190 = vmatpush1.msra.mxu0 0.0
      %191 = vmatprep.subr.mxu0 0.0
      %192 = vmatpush1.msra.mxu0 0.0
      %193 = vmatprep.subr.mxu0 0.0
      %194 = vmatpush1.msra.mxu0 0.0
      %195 = vmatprep.subr.mxu0 0.0
      %196 = vmatpush1.msra.mxu0 0.0
      %197 = vmatprep.subr.mxu0 0.0
      %198 = vmatpush1.msra.mxu0 0.0
      %199 = vmatprep.subr.mxu0 0.0
      %200 = vmatpush1.msra.mxu0 0.0
      %201 = vmatprep.subr.mxu0 0.0
      %202 = vmatpush1.msra.mxu0 0.0
      %203 = vmatprep.subr.mxu0 0.0
      %204 = vmatpush1.msra.mxu0 0.0
      %205 = vmatprep.subr.mxu0 0.0
      %206 = vmatpush1.msra.mxu0 0.0
      %207 = vmatprep.subr.mxu0 0.0
      %208 = vmatpush1.msra.mxu0 0.0
      %209 = vmatprep.subr.mxu0 0.0
      %210 = vmatpush1.msra.mxu0 0.0
      %211 = vmatprep.subr.mxu0 0.0
      %212 = vmatpush1.msra.mxu0 0.0
      %213 = vmatprep.subr.mxu0 0.0
      %214 = vmatpush1.msra.mxu0 0.0
      %215 = vmatprep.subr.mxu0 0.0
      %216 = vmatpush1.msra.mxu0 0.0
      %217 = vmatprep.subr.mxu0 0.0
      %218 = vmatpush1.msra.mxu0 0.0
      %219 = vmatprep.subr.mxu0 0.0
      %220 = vmatpush1.msra.mxu0 0.0
      %221 = vmatprep.subr.mxu0 0.0
      %222 = vmatpush1.msra.mxu0 0.0
      %223 = vmatprep.subr.mxu0 0.0
      %224 = vmatpush1.msra.mxu0 0.0
      %225 = vmatprep.subr.mxu0 0.0
      %226 = vmatpush1.msra.mxu0 0.0
      %227 = vmatprep.subr.mxu0 0.0
      %228 = vmatpush1.msra.mxu0 0.0
      %229 = vmatprep.subr.mxu0 0.0
      %230 = vmatpush1.msra.mxu0 0.0
      %231 = vmatprep.subr.mxu0 0.0
      %232 = vmatpush1.msra.mxu0 0.0
      %233 = vmatprep.subr.mxu0 0.0
      %234 = vmatpush1.msra.mxu0 0.0
      %235 = vmatprep.subr.mxu0 0.0
      %236 = vmatpush1.msra.mxu0 0.0
      %237 = vmatprep.subr.mxu0 0.0
      %238 = vmatpush1.msra.mxu0 0.0
      %239 = vmatprep.subr.mxu0 0.0
      %240 = vmatpush1.msra.mxu0 0.0
      %241 = vmatprep.subr.mxu0 0.0
      %242 = vmatpush1.msra.mxu0 0.0
      %243 = vmatprep.mubr.f32.mxu0 0.0
      %244 = vmatmul.mubr.f32.gmra.mrb[0].mxu0 %v168
      %v245 = vpop.f32.mrb[0].mxu0
      %v246 = vadd.f32 0.0, %v245
      %v247 = vpop.f32.mrb[0].mxu0
      %248 = vmatprep.mubr.f32.mxu0 0.0
      %249 = vmatmul.mubr.f32.gmra.mrb[0].mxu0 %v171
      %v250 = vpop.f32.mrb[0].mxu0
      %v251 = vadd.f32 0.0, %v250
      %v252 = vpop.f32.mrb[0].mxu0
      %253 = vmatprep.mubr.f32.mxu0 0.0
      %254 = vmatmul.mubr.f32.gmra.mrb[0].mxu0 %v174
      %v255 = vpop.f32.mrb[0].mxu0
      %v256 = vadd.f32 0.0, %v255
      %v257 = vpop.f32.mrb[0].mxu0
      %258 = vmatprep.mubr.f32.mxu0 0.0
      %259 = vmatmul.mubr.f32.gmra.mrb[0].mxu0 %v177
      %v260 = vpop.f32.mrb[0].mxu0
      %v261 = vadd.f32 0.0, %v260
      %v262 = vpop.f32.mrb[0].mxu0
      %263 = vdwg.mxu0
      %265 = vset.pattern.permute.xlu0 0
      %266 = vperm.xlu0 %265, %v156
      %v267 = vpop.permute.xlu0 %266
      %270 = vset.pattern.permute.xlu0 0
      %271 = vperm.xlu0 %270, %v157
      %v272 = vpop.permute.xlu0 %271
      %v274 = vmul.f32 %v246, %v267
      %v275 = vmul.f32 %v251, %v272
      %v276 = vmul.f32 %v256, %v267
      %v277 = vmul.f32 %v261, %v272
      %v279 = vsel %vm166, %v246, 0
      %v282 = vsel %vm166, %v251, 0
      %284 = vmatprep.subr.mxu0 0.0
      %285 = vmatpush1.xpose.msra.mxu0 %v168
      %286 = vmatprep.subr.mxu0 0.0
      %287 = vmatpush1.xpose.msra.mxu0 %v171
      %288 = vmatprep.subr.mxu0 0.0
      %289 = vmatpush1.xpose.msra.mxu0 0.0
      %290 = vmatprep.subr.mxu0 0.0
      %291 = vmatpush1.xpose.msra.mxu0 0.0
      %292 = vmatprep.subr.mxu0 0.0
      %293 = vmatpush1.xpose.msra.mxu0 0.0
      %294 = vmatprep.subr.mxu0 0.0
      %295 = vmatpush1.xpose.msra.mxu0 0.0
      %296 = vmatprep.subr.mxu0 0.0
      %297 = vmatpush1.xpose.msra.mxu0 0.0
      %298 = vmatprep.subr.mxu0 0.0
      %299 = vmatpush1.xpose.msra.mxu0 0.0
      %300 = vmatprep.subr.mxu0 0.0
      %301 = vmatpush1.xpose.msra.mxu0 0.0
      %302 = vmatprep.subr.mxu0 0.0
      %303 = vmatpush1.xpose.msra.mxu0 0.0
      %304 = vmatprep.subr.mxu0 0.0
      %305 = vmatpush1.xpose.msra.mxu0 0.0
      %306 = vmatprep.subr.mxu0 0.0
      %307 = vmatpush1.xpose.msra.mxu0 0.0
      %308 = vmatprep.subr.mxu0 0.0
      %309 = vmatpush1.xpose.msra.mxu0 0.0
      %310 = vmatprep.subr.mxu0 0.0
      %311 = vmatpush1.xpose.msra.mxu0 0.0
      %312 = vmatprep.subr.mxu0 0.0
      %313 = vmatpush1.xpose.msra.mxu0 0.0
      %314 = vmatprep.subr.mxu0 0.0
      %315 = vmatpush1.xpose.msra.mxu0 0.0
      %316 = vmatprep.subr.mxu0 0.0
      %317 = vmatpush1.xpose.msra.mxu0 0.0
      %318 = vmatprep.subr.mxu0 0.0
      %319 = vmatpush1.xpose.msra.mxu0 0.0
      %320 = vmatprep.subr.mxu0 0.0
      %321 = vmatpush1.xpose.msra.mxu0 0.0
      %322 = vmatprep.subr.mxu0 0.0
      %323 = vmatpush1.xpose.msra.mxu0 0.0
      %324 = vmatprep.subr.mxu0 0.0
      %325 = vmatpush1.xpose.msra.mxu0 0.0
      %326 = vmatprep.subr.mxu0 0.0
      %327 = vmatpush1.xpose.msra.mxu0 0.0
      %328 = vmatprep.subr.mxu0 0.0
      %329 = vmatpush1.xpose.msra.mxu0 0.0
      %330 = vmatprep.subr.mxu0 0.0
      %331 = vmatpush1.xpose.msra.mxu0 0.0
      %332 = vmatprep.subr.mxu0 0.0
      %333 = vmatpush1.xpose.msra.mxu0 0.0
      %334 = vmatprep.subr.mxu0 0.0
      %335 = vmatpush1.xpose.msra.mxu0 0.0
      %336 = vmatprep.subr.mxu0 0.0
      %337 = vmatpush1.xpose.msra.mxu0 0.0
      %338 = vmatprep.subr.mxu0 0.0
      %339 = vmatpush1.xpose.msra.mxu0 0.0
      %340 = vmatprep.subr.mxu0 0.0
      %341 = vmatpush1.xpose.msra.mxu0 0.0
      %342 = vmatprep.subr.mxu0 0.0
      %343 = vmatpush1.xpose.msra.mxu0 0.0
      %344 = vmatprep.subr.mxu0 0.0
      %345 = vmatpush1.xpose.msra.mxu0 0.0
      %346 = vmatprep.subr.mxu0 0.0
      %347 = vmatpush1.xpose.msra.mxu0 0.0
      %348 = vmatprep.mubr.f32.mxu0 0.0
      %349 = vmatmul.mubr.f32.gmra.mrb[0].mxu0 %v279
      %v350 = vpop.f32.mrb[0].mxu0
      %v351 = vadd.f32 0.0, %v350
      %v352 = vpop.f32.mrb[0].mxu0
      %353 = vmatprep.mubr.f32.mxu0 0.0
      %354 = vmatmul.mubr.f32.gmra.mrb[0].mxu0 %v282
      %v355 = vpop.f32.mrb[0].mxu0
      %v356 = vadd.f32 0.0, %v355
      %v357 = vpop.f32.mrb[0].mxu0
      %358 = vdwg.mxu0
      %359 = vrot.lane.b32.xlu0 %v246, 96
      %v360 = vpop.permute.xlu0 %359
      %361 = vrot.lane.b32.xlu0 %v251, 96
      %v362 = vpop.permute.xlu0 %361
      %v363 = vsel %vm166, %v360, 0
      %v365 = vsel %vm166, %v362, 0
      %367 = vmatprep.subr.mxu0 0.0
      %368 = vmatpush1.xpose.msra.mxu0 %v168
      %369 = vmatprep.subr.mxu0 0.0
      %370 = vmatpush1.xpose.msra.mxu0 %v171
      %371 = vmatprep.subr.mxu0 0.0
      %372 = vmatpush1.xpose.msra.mxu0 0.0
      %373 = vmatprep.subr.mxu0 0.0
      %374 = vmatpush1.xpose.msra.mxu0 0.0
      %375 = vmatprep.subr.mxu0 0.0
      %376 = vmatpush1.xpose.msra.mxu0 0.0
      %377 = vmatprep.subr.mxu0 0.0
      %378 = vmatpush1.xpose.msra.mxu0 0.0
      %379 = vmatprep.subr.mxu0 0.0
      %380 = vmatpush1.xpose.msra.mxu0 0.0
      %381 = vmatprep.subr.mxu0 0.0
      %382 = vmatpush1.xpose.msra.mxu0 0.0
      %383 = vmatprep.subr.mxu0 0.0
      %384 = vmatpush1.xpose.msra.mxu0 0.0
      %385 = vmatprep.subr.mxu0 0.0
      %386 = vmatpush1.xpose.msra.mxu0 0.0
      %387 = vmatprep.subr.mxu0 0.0
      %388 = vmatpush1.xpose.msra.mxu0 0.0
      %389 = vmatprep.subr.mxu0 0.0
      %390 = vmatpush1.xpose.msra.mxu0 0.0
      %391 = vmatprep.subr.mxu0 0.0
      %392 = vmatpush1.xpose.msra.mxu0 0.0
      %393 = vmatprep.subr.mxu0 0.0
      %394 = vmatpush1.xpose.msra.mxu0 0.0
      %395 = vmatprep.subr.mxu0 0.0
      %396 = vmatpush1.xpose.msra.mxu0 0.0
      %397 = vmatprep.subr.mxu0 0.0
      %398 = vmatpush1.xpose.msra.mxu0 0.0
      %399 = vmatprep.subr.mxu0 0.0
      %400 = vmatpush1.xpose.msra.mxu0 0.0
      %401 = vmatprep.subr.mxu0 0.0
      %402 = vmatpush1.xpose.msra.mxu0 0.0
      %403 = vmatprep.subr.mxu0 0.0
      %404 = vmatpush1.xpose.msra.mxu0 0.0
      %405 = vmatprep.subr.mxu0 0.0
      %406 = vmatpush1.xpose.msra.mxu0 0.0
      %407 = vmatprep.subr.mxu0 0.0
      %408 = vmatpush1.xpose.msra.mxu0 0.0
      %409 = vmatprep.subr.mxu0 0.0
      %410 = vmatpush1.xpose.msra.mxu0 0.0
      %411 = vmatprep.subr.mxu0 0.0
      %412 = vmatpush1.xpose.msra.mxu0 0.0
      %413 = vmatprep.subr.mxu0 0.0
      %414 = vmatpush1.xpose.msra.mxu0 0.0
      %415 = vmatprep.subr.mxu0 0.0
      %416 = vmatpush1.xpose.msra.mxu0 0.0
      %417 = vmatprep.subr.mxu0 0.0
      %418 = vmatpush1.xpose.msra.mxu0 0.0
      %419 = vmatprep.subr.mxu0 0.0
      %420 = vmatpush1.xpose.msra.mxu0 0.0
      %421 = vmatprep.subr.mxu0 0.0
      %422 = vmatpush1.xpose.msra.mxu0 0.0
      %423 = vmatprep.subr.mxu0 0.0
      %424 = vmatpush1.xpose.msra.mxu0 0.0
      %425 = vmatprep.subr.mxu0 0.0
      %426 = vmatpush1.xpose.msra.mxu0 0.0
      %427 = vmatprep.subr.mxu0 0.0
      %428 = vmatpush1.xpose.msra.mxu0 0.0
      %429 = vmatprep.subr.mxu0 0.0
      %430 = vmatpush1.xpose.msra.mxu0 0.0
      %431 = vmatprep.mubr.f32.mxu0 0.0
      %432 = vmatmul.mubr.f32.gmra.mrb[0].mxu0 %v363
      %v433 = vpop.f32.mrb[0].mxu0
      %v434 = vadd.f32 0.0, %v433
      %v435 = vpop.f32.mrb[0].mxu0
      %436 = vmatprep.mubr.f32.mxu0 0.0
      %437 = vmatmul.mubr.f32.gmra.mrb[0].mxu0 %v365
      %v438 = vpop.f32.mrb[0].mxu0
      %v439 = vadd.f32 0.0, %v438
      %v440 = vpop.f32.mrb[0].mxu0
      %441 = vdwg.mxu0
      %444 = vrot.lane.b32.xlu0 %v274, 32
      %v445 = vpop.permute.xlu0 %444
      %446 = vrot.lane.b32.xlu0 %v275, 32
      %v447 = vpop.permute.xlu0 %446
      %vm450 = vcmask 130048
      %v452 = vsel %vm450, %v434, 0
      %v455 = vsel %vm450, %v439, 0
      %457 = vmatprep.subr.mxu0 0.0
      %458 = vmatpush1.msra.mxu0 %v445
      %459 = vmatprep.subr.mxu0 0.0
      %460 = vmatpush1.msra.mxu0 %v447
      %461 = vmatprep.subr.mxu0 0.0
      %462 = vmatpush1.msra.mxu0 0.0
      %463 = vmatprep.subr.mxu0 0.0
      %464 = vmatpush1.msra.mxu0 0.0
      %465 = vmatprep.subr.mxu0 0.0
      %466 = vmatpush1.msra.mxu0 0.0
      %467 = vmatprep.subr.mxu0 0.0
      %468 = vmatpush1.msra.mxu0 0.0
      %469 = vmatprep.subr.mxu0 0.0
      %470 = vmatpush1.msra.mxu0 0.0
      %471 = vmatprep.subr.mxu0 0.0
      %472 = vmatpush1.msra.mxu0 0.0
      %473 = vmatprep.subr.mxu0 0.0
      %474 = vmatpush1.msra.mxu0 0.0
      %475 = vmatprep.subr.mxu0 0.0
      %476 = vmatpush1.msra.mxu0 0.0
      %477 = vmatprep.subr.mxu0 0.0
      %478 = vmatpush1.msra.mxu0 0.0
      %479 = vmatprep.subr.mxu0 0.0
      %480 = vmatpush1.msra.mxu0 0.0
      %481 = vmatprep.subr.mxu0 0.0
      %482 = vmatpush1.msra.mxu0 0.0
      %483 = vmatprep.subr.mxu0 0.0
      %484 = vmatpush1.msra.mxu0 0.0
      %485 = vmatprep.subr.mxu0 0.0
      %486 = vmatpush1.msra.mxu0 0.0
      %487 = vmatprep.subr.mxu0 0.0
      %488 = vmatpush1.msra.mxu0 0.0
      %489 = vmatprep.subr.mxu0 0.0
      %490 = vmatpush1.msra.mxu0 0.0
      %491 = vmatprep.subr.mxu0 0.0
      %492 = vmatpush1.msra.mxu0 0.0
      %493 = vmatprep.subr.mxu0 0.0
      %494 = vmatpush1.msra.mxu0 0.0
      %495 = vmatprep.subr.mxu0 0.0
      %496 = vmatpush1.msra.mxu0 0.0
      %497 = vmatprep.subr.mxu0 0.0
      %498 = vmatpush1.msra.mxu0 0.0
      %499 = vmatprep.subr.mxu0 0.0
      %500 = vmatpush1.msra.mxu0 0.0
      %501 = vmatprep.subr.mxu0 0.0
      %502 = vmatpush1.msra.mxu0 0.0
      %503 = vmatprep.subr.mxu0 0.0
      %504 = vmatpush1.msra.mxu0 0.0
      %505 = vmatprep.subr.mxu0 0.0
      %506 = vmatpush1.msra.mxu0 0.0
      %507 = vmatprep.subr.mxu0 0.0
      %508 = vmatpush1.msra.mxu0 0.0
      %509 = vmatprep.subr.mxu0 0.0
      %510 = vmatpush1.msra.mxu0 0.0
      %511 = vmatprep.subr.mxu0 0.0
      %512 = vmatpush1.msra.mxu0 0.0
      %513 = vmatprep.subr.mxu0 0.0
      %514 = vmatpush1.msra.mxu0 0.0
      %515 = vmatprep.subr.mxu0 0.0
      %516 = vmatpush1.msra.mxu0 0.0
      %517 = vmatprep.subr.mxu0 0.0
      %518 = vmatpush1.msra.mxu0 0.0
      %519 = vmatprep.subr.mxu0 0.0
      %520 = vmatpush1.msra.mxu0 0.0
      %521 = vmatprep.mubr.f32.mxu0 0.0
      %522 = vmatmul.mubr.f32.gmra.mrb[0].mxu0 %v452
      %v523 = vpop.f32.mrb[0].mxu0
      %v524 = vadd.f32 0.0, %v523
      %v525 = vpop.f32.mrb[0].mxu0
      %526 = vmatprep.mubr.f32.mxu0 0.0
      %527 = vmatmul.mubr.f32.gmra.mrb[0].mxu0 %v455
      %v528 = vpop.f32.mrb[0].mxu0
      %v529 = vadd.f32 0.0, %v528
      %v530 = vpop.f32.mrb[0].mxu0
      %531 = vdwg.mxu0
      %532 = vrot.lane.b32.xlu0 %v274, 64
      %v533 = vpop.permute.xlu0 %532
      %534 = vrot.lane.b32.xlu0 %v275, 64
      %v535 = vpop.permute.xlu0 %534
      %v539 = vsel %vm450, %v351, 0
      %v542 = vsel %vm450, %v356, 0
      %544 = vmatprep.subr.mxu0 0.0
      %545 = vmatpush1.msra.mxu0 %v533
      %546 = vmatprep.subr.mxu0 0.0
      %547 = vmatpush1.msra.mxu0 %v535
      %548 = vmatprep.subr.mxu0 0.0
      %549 = vmatpush1.msra.mxu0 0.0
      %550 = vmatprep.subr.mxu0 0.0
      %551 = vmatpush1.msra.mxu0 0.0
      %552 = vmatprep.subr.mxu0 0.0
      %553 = vmatpush1.msra.mxu0 0.0
      %554 = vmatprep.subr.mxu0 0.0
      %555 = vmatpush1.msra.mxu0 0.0
      %556 = vmatprep.subr.mxu0 0.0
      %557 = vmatpush1.msra.mxu0 0.0
      %558 = vmatprep.subr.mxu0 0.0
      %559 = vmatpush1.msra.mxu0 0.0
      %560 = vmatprep.subr.mxu0 0.0
      %561 = vmatpush1.msra.mxu0 0.0
      %562 = vmatprep.subr.mxu0 0.0
      %563 = vmatpush1.msra.mxu0 0.0
      %564 = vmatprep.subr.mxu0 0.0
      %565 = vmatpush1.msra.mxu0 0.0
      %566 = vmatprep.subr.mxu0 0.0
      %567 = vmatpush1.msra.mxu0 0.0
      %568 = vmatprep.subr.mxu0 0.0
      %569 = vmatpush1.msra.mxu0 0.0
      %570 = vmatprep.subr.mxu0 0.0
      %571 = vmatpush1.msra.mxu0 0.0
      %572 = vmatprep.subr.mxu0 0.0
      %573 = vmatpush1.msra.mxu0 0.0
      %574 = vmatprep.subr.mxu0 0.0
      %575 = vmatpush1.msra.mxu0 0.0
      %576 = vmatprep.subr.mxu0 0.0
      %577 = vmatpush1.msra.mxu0 0.0
      %578 = vmatprep.subr.mxu0 0.0
      %579 = vmatpush1.msra.mxu0 0.0
      %580 = vmatprep.subr.mxu0 0.0
      %581 = vmatpush1.msra.mxu0 0.0
      %582 = vmatprep.subr.mxu0 0.0
      %583 = vmatpush1.msra.mxu0 0.0
      %584 = vmatprep.subr.mxu0 0.0
      %585 = vmatpush1.msra.mxu0 0.0
      %586 = vmatprep.subr.mxu0 0.0
      %587 = vmatpush1.msra.mxu0 0.0
      %588 = vmatprep.subr.mxu0 0.0
      %589 = vmatpush1.msra.mxu0 0.0
      %590 = vmatprep.subr.mxu0 0.0
      %591 = vmatpush1.msra.mxu0 0.0
      %592 = vmatprep.subr.mxu0 0.0
      %593 = vmatpush1.msra.mxu0 0.0
      %594 = vmatprep.subr.mxu0 0.0
      %595 = vmatpush1.msra.mxu0 0.0
      %596 = vmatprep.subr.mxu0 0.0
      %597 = vmatpush1.msra.mxu0 0.0
      %598 = vmatprep.subr.mxu0 0.0
      %599 = vmatpush1.msra.mxu0 0.0
      %600 = vmatprep.subr.mxu0 0.0
      %601 = vmatpush1.msra.mxu0 0.0
      %602 = vmatprep.subr.mxu0 0.0
      %603 = vmatpush1.msra.mxu0 0.0
      %604 = vmatprep.subr.mxu0 0.0
      %605 = vmatpush1.msra.mxu0 0.0
      %606 = vmatprep.subr.mxu0 0.0
      %607 = vmatpush1.msra.mxu0 0.0
      %608 = vmatprep.mubr.f32.mxu0 0.0
      %609 = vmatmul.mubr.f32.gmra.mrb[0].mxu0 %v539
      %v610 = vpop.f32.mrb[0].mxu0
      %v611 = vadd.f32 %v524, %v610
      %v612 = vpop.f32.mrb[0].mxu0
      %613 = vmatprep.mubr.f32.mxu0 0.0
      %614 = vmatmul.mubr.f32.gmra.mrb[0].mxu0 %v542
      %v615 = vpop.f32.mrb[0].mxu0
      %v616 = vadd.f32 %v529, %v615
      %v617 = vpop.f32.mrb[0].mxu0
      %618 = vdwg.mxu0
      %v620 = vsel %vm166, %v256, 0
      %v623 = vsel %vm166, %v261, 0
      %625 = vmatprep.subr.mxu0 0.0
      %626 = vmatpush1.xpose.msra.mxu0 %v174
      %627 = vmatprep.subr.mxu0 0.0
      %628 = vmatpush1.xpose.msra.mxu0 %v177
      %629 = vmatprep.subr.mxu0 0.0
      %630 = vmatpush1.xpose.msra.mxu0 0.0
      %631 = vmatprep.subr.mxu0 0.0
      %632 = vmatpush1.xpose.msra.mxu0 0.0
      %633 = vmatprep.subr.mxu0 0.0
      %634 = vmatpush1.xpose.msra.mxu0 0.0
      %635 = vmatprep.subr.mxu0 0.0
      %636 = vmatpush1.xpose.msra.mxu0 0.0
      %637 = vmatprep.subr.mxu0 0.0
      %638 = vmatpush1.xpose.msra.mxu0 0.0
      %639 = vmatprep.subr.mxu0 0.0
      %640 = vmatpush1.xpose.msra.mxu0 0.0
      %641 = vmatprep.subr.mxu0 0.0
      %642 = vmatpush1.xpose.msra.mxu0 0.0
      %643 = vmatprep.subr.mxu0 0.0
      %644 = vmatpush1.xpose.msra.mxu0 0.0
      %645 = vmatprep.subr.mxu0 0.0
      %646 = vmatpush1.xpose.msra.mxu0 0.0
      %647 = vmatprep.subr.mxu0 0.0
      %648 = vmatpush1.xpose.msra.mxu0 0.0
      %649 = vmatprep.subr.mxu0 0.0
      %650 = vmatpush1.xpose.msra.mxu0 0.0
      %651 = vmatprep.subr.mxu0 0.0
      %652 = vmatpush1.xpose.msra.mxu0 0.0
      %653 = vmatprep.subr.mxu0 0.0
      %654 = vmatpush1.xpose.msra.mxu0 0.0
      %655 = vmatprep.subr.mxu0 0.0
      %656 = vmatpush1.xpose.msra.mxu0 0.0
      %657 = vmatprep.subr.mxu0 0.0
      %658 = vmatpush1.xpose.msra.mxu0 0.0
      %659 = vmatprep.subr.mxu0 0.0
      %660 = vmatpush1.xpose.msra.mxu0 0.0
      %661 = vmatprep.subr.mxu0 0.0
      %662 = vmatpush1.xpose.msra.mxu0 0.0
      %663 = vmatprep.subr.mxu0 0.0
      %664 = vmatpush1.xpose.msra.mxu0 0.0
      %665 = vmatprep.subr.mxu0 0.0
      %666 = vmatpush1.xpose.msra.mxu0 0.0
      %667 = vmatprep.subr.mxu0 0.0
      %668 = vmatpush1.xpose.msra.mxu0 0.0
      %669 = vmatprep.subr.mxu0 0.0
      %670 = vmatpush1.xpose.msra.mxu0 0.0
      %671 = vmatprep.subr.mxu0 0.0
      %672 = vmatpush1.xpose.msra.mxu0 0.0
      %673 = vmatprep.subr.mxu0 0.0
      %674 = vmatpush1.xpose.msra.mxu0 0.0
      %675 = vmatprep.subr.mxu0 0.0
      %676 = vmatpush1.xpose.msra.mxu0 0.0
      %677 = vmatprep.subr.mxu0 0.0
      %678 = vmatpush1.xpose.msra.mxu0 0.0
      %679 = vmatprep.subr.mxu0 0.0
      %680 = vmatpush1.xpose.msra.mxu0 0.0
      %681 = vmatprep.subr.mxu0 0.0
      %682 = vmatpush1.xpose.msra.mxu0 0.0
      %683 = vmatprep.subr.mxu0 0.0
      %684 = vmatpush1.xpose.msra.mxu0 0.0
      %685 = vmatprep.subr.mxu0 0.0
      %686 = vmatpush1.xpose.msra.mxu0 0.0
      %687 = vmatprep.subr.mxu0 0.0
      %688 = vmatpush1.xpose.msra.mxu0 0.0
      %689 = vmatprep.mubr.f32.mxu0 0.0
      %690 = vmatmul.mubr.f32.gmra.mrb[0].mxu0 %v620
      %v691 = vpop.f32.mrb[0].mxu0
      %v692 = vadd.f32 0.0, %v691
      %v693 = vpop.f32.mrb[0].mxu0
      %694 = vmatprep.mubr.f32.mxu0 0.0
      %695 = vmatmul.mubr.f32.gmra.mrb[0].mxu0 %v623
      %v696 = vpop.f32.mrb[0].mxu0
      %v697 = vadd.f32 0.0, %v696
      %v698 = vpop.f32.mrb[0].mxu0
      %699 = vdwg.mxu0
      %700 = vrot.lane.b32.xlu0 %v256, 96
      %v701 = vpop.permute.xlu0 %700
      %702 = vrot.lane.b32.xlu0 %v261, 96
      %v703 = vpop.permute.xlu0 %702
      %v704 = vsel %vm166, %v701, 0
      %v706 = vsel %vm166, %v703, 0
      %708 = vmatprep.subr.mxu0 0.0
      %709 = vmatpush1.xpose.msra.mxu0 %v174
      %710 = vmatprep.subr.mxu0 0.0
      %711 = vmatpush1.xpose.msra.mxu0 %v177
      %712 = vmatprep.subr.mxu0 0.0
      %713 = vmatpush1.xpose.msra.mxu0 0.0
      %714 = vmatprep.subr.mxu0 0.0
      %715 = vmatpush1.xpose.msra.mxu0 0.0
      %716 = vmatprep.subr.mxu0 0.0
      %717 = vmatpush1.xpose.msra.mxu0 0.0
      %718 = vmatprep.subr.mxu0 0.0
      %719 = vmatpush1.xpose.msra.mxu0 0.0
      %720 = vmatprep.subr.mxu0 0.0
      %721 = vmatpush1.xpose.msra.mxu0 0.0
      %722 = vmatprep.subr.mxu0 0.0
      %723 = vmatpush1.xpose.msra.mxu0 0.0
      %724 = vmatprep.subr.mxu0 0.0
      %725 = vmatpush1.xpose.msra.mxu0 0.0
      %726 = vmatprep.subr.mxu0 0.0
      %727 = vmatpush1.xpose.msra.mxu0 0.0
      %728 = vmatprep.subr.mxu0 0.0
      %729 = vmatpush1.xpose.msra.mxu0 0.0
      %730 = vmatprep.subr.mxu0 0.0
      %731 = vmatpush1.xpose.msra.mxu0 0.0
      %732 = vmatprep.subr.mxu0 0.0
      %733 = vmatpush1.xpose.msra.mxu0 0.0
      %734 = vmatprep.subr.mxu0 0.0
      %735 = vmatpush1.xpose.msra.mxu0 0.0
      %736 = vmatprep.subr.mxu0 0.0
      %737 = vmatpush1.xpose.msra.mxu0 0.0
      %738 = vmatprep.subr.mxu0 0.0
      %739 = vmatpush1.xpose.msra.mxu0 0.0
      %740 = vmatprep.subr.mxu0 0.0
      %741 = vmatpush1.xpose.msra.mxu0 0.0
      %742 = vmatprep.subr.mxu0 0.0
      %743 = vmatpush1.xpose.msra.mxu0 0.0
      %744 = vmatprep.subr.mxu0 0.0
      %745 = vmatpush1.xpose.msra.mxu0 0.0
      %746 = vmatprep.subr.mxu0 0.0
      %747 = vmatpush1.xpose.msra.mxu0 0.0
      %748 = vmatprep.subr.mxu0 0.0
      %749 = vmatpush1.xpose.msra.mxu0 0.0
      %750 = vmatprep.subr.mxu0 0.0
      %751 = vmatpush1.xpose.msra.mxu0 0.0
      %752 = vmatprep.subr.mxu0 0.0
      %753 = vmatpush1.xpose.msra.mxu0 0.0
      %754 = vmatprep.subr.mxu0 0.0
      %755 = vmatpush1.xpose.msra.mxu0 0.0
      %756 = vmatprep.subr.mxu0 0.0
      %757 = vmatpush1.xpose.msra.mxu0 0.0
      %758 = vmatprep.subr.mxu0 0.0
      %759 = vmatpush1.xpose.msra.mxu0 0.0
      %760 = vmatprep.subr.mxu0 0.0
      %761 = vmatpush1.xpose.msra.mxu0 0.0
      %762 = vmatprep.subr.mxu0 0.0
      %763 = vmatpush1.xpose.msra.mxu0 0.0
      %764 = vmatprep.subr.mxu0 0.0
      %765 = vmatpush1.xpose.msra.mxu0 0.0
      %766 = vmatprep.subr.mxu0 0.0
      %767 = vmatpush1.xpose.msra.mxu0 0.0
      %768 = vmatprep.subr.mxu0 0.0
      %769 = vmatpush1.xpose.msra.mxu0 0.0
      %770 = vmatprep.subr.mxu0 0.0
      %771 = vmatpush1.xpose.msra.mxu0 0.0
      %772 = vmatprep.mubr.f32.mxu0 0.0
      %773 = vmatmul.mubr.f32.gmra.mrb[0].mxu0 %v704
      %v774 = vpop.f32.mrb[0].mxu0
      %v775 = vadd.f32 0.0, %v774
      %v776 = vpop.f32.mrb[0].mxu0
      %777 = vmatprep.mubr.f32.mxu0 0.0
      %778 = vmatmul.mubr.f32.gmra.mrb[0].mxu0 %v706
      %v779 = vpop.f32.mrb[0].mxu0
      %v780 = vadd.f32 0.0, %v779
      %v781 = vpop.f32.mrb[0].mxu0
      %782 = vdwg.mxu0
      %785 = vrot.lane.b32.xlu0 %v276, 32
      %v786 = vpop.permute.xlu0 %785
      %787 = vrot.lane.b32.xlu0 %v277, 32
      %v788 = vpop.permute.xlu0 %787
      %v792 = vsel %vm450, %v775, 0
      %v795 = vsel %vm450, %v780, 0
      %797 = vmatprep.subr.mxu0 0.0
      %798 = vmatpush1.msra.mxu0 %v786
      %799 = vmatprep.subr.mxu0 0.0
      %800 = vmatpush1.msra.mxu0 %v788
      %801 = vmatprep.subr.mxu0 0.0
      %802 = vmatpush1.msra.mxu0 0.0
      %803 = vmatprep.subr.mxu0 0.0
      %804 = vmatpush1.msra.mxu0 0.0
      %805 = vmatprep.subr.mxu0 0.0
      %806 = vmatpush1.msra.mxu0 0.0
      %807 = vmatprep.subr.mxu0 0.0
      %808 = vmatpush1.msra.mxu0 0.0
      %809 = vmatprep.subr.mxu0 0.0
      %810 = vmatpush1.msra.mxu0 0.0
      %811 = vmatprep.subr.mxu0 0.0
      %812 = vmatpush1.msra.mxu0 0.0
      %813 = vmatprep.subr.mxu0 0.0
      %814 = vmatpush1.msra.mxu0 0.0
      %815 = vmatprep.subr.mxu0 0.0
      %816 = vmatpush1.msra.mxu0 0.0
      %817 = vmatprep.subr.mxu0 0.0
      %818 = vmatpush1.msra.mxu0 0.0
      %819 = vmatprep.subr.mxu0 0.0
      %820 = vmatpush1.msra.mxu0 0.0
      %821 = vmatprep.subr.mxu0 0.0
      %822 = vmatpush1.msra.mxu0 0.0
      %823 = vmatprep.subr.mxu0 0.0
      %824 = vmatpush1.msra.mxu0 0.0
      %825 = vmatprep.subr.mxu0 0.0
      %826 = vmatpush1.msra.mxu0 0.0
      %827 = vmatprep.subr.mxu0 0.0
      %828 = vmatpush1.msra.mxu0 0.0
      %829 = vmatprep.subr.mxu0 0.0
      %830 = vmatpush1.msra.mxu0 0.0
      %831 = vmatprep.subr.mxu0 0.0
      %832 = vmatpush1.msra.mxu0 0.0
      %833 = vmatprep.subr.mxu0 0.0
      %834 = vmatpush1.msra.mxu0 0.0
      %835 = vmatprep.subr.mxu0 0.0
      %836 = vmatpush1.msra.mxu0 0.0
      %837 = vmatprep.subr.mxu0 0.0
      %838 = vmatpush1.msra.mxu0 0.0
      %839 = vmatprep.subr.mxu0 0.0
      %840 = vmatpush1.msra.mxu0 0.0
      %841 = vmatprep.subr.mxu0 0.0
      %842 = vmatpush1.msra.mxu0 0.0
      %843 = vmatprep.subr.mxu0 0.0
      %844 = vmatpush1.msra.mxu0 0.0
      %845 = vmatprep.subr.mxu0 0.0
      %846 = vmatpush1.msra.mxu0 0.0
      %847 = vmatprep.subr.mxu0 0.0
      %848 = vmatpush1.msra.mxu0 0.0
      %849 = vmatprep.subr.mxu0 0.0
      %850 = vmatpush1.msra.mxu0 0.0
      %851 = vmatprep.subr.mxu0 0.0
      %852 = vmatpush1.msra.mxu0 0.0
      %853 = vmatprep.subr.mxu0 0.0
      %854 = vmatpush1.msra.mxu0 0.0
      %855 = vmatprep.subr.mxu0 0.0
      %856 = vmatpush1.msra.mxu0 0.0
      %857 = vmatprep.subr.mxu0 0.0
      %858 = vmatpush1.msra.mxu0 0.0
      %859 = vmatprep.subr.mxu0 0.0
      %860 = vmatpush1.msra.mxu0 0.0
      %861 = vmatprep.mubr.f32.mxu0 0.0
      %862 = vmatmul.mubr.f32.gmra.mrb[0].mxu0 %v792
      %v863 = vpop.f32.mrb[0].mxu0
      %v864 = vadd.f32 0.0, %v863
      %v865 = vpop.f32.mrb[0].mxu0
      %866 = vmatprep.mubr.f32.mxu0 0.0
      %867 = vmatmul.mubr.f32.gmra.mrb[0].mxu0 %v795
      %v868 = vpop.f32.mrb[0].mxu0
      %v869 = vadd.f32 0.0, %v868
      %v870 = vpop.f32.mrb[0].mxu0
      %871 = vdwg.mxu0
      %872 = vrot.lane.b32.xlu0 %v276, 64
      %v873 = vpop.permute.xlu0 %872
      %874 = vrot.lane.b32.xlu0 %v277, 64
      %v875 = vpop.permute.xlu0 %874
      %v879 = vsel %vm450, %v692, 0
      %v882 = vsel %vm450, %v697, 0
      %884 = vmatprep.subr.mxu0 0.0
      %885 = vmatpush1.msra.mxu0 %v873
      %886 = vmatprep.subr.mxu0 0.0
      %887 = vmatpush1.msra.mxu0 %v875
      %888 = vmatprep.subr.mxu0 0.0
      %889 = vmatpush1.msra.mxu0 0.0
      %890 = vmatprep.subr.mxu0 0.0
      %891 = vmatpush1.msra.mxu0 0.0
      %892 = vmatprep.subr.mxu0 0.0
      %893 = vmatpush1.msra.mxu0 0.0
      %894 = vmatprep.subr.mxu0 0.0
      %895 = vmatpush1.msra.mxu0 0.0
      %896 = vmatprep.subr.mxu0 0.0
      %897 = vmatpush1.msra.mxu0 0.0
      %898 = vmatprep.subr.mxu0 0.0
      %899 = vmatpush1.msra.mxu0 0.0
      %900 = vmatprep.subr.mxu0 0.0
      %901 = vmatpush1.msra.mxu0 0.0
      %902 = vmatprep.subr.mxu0 0.0
      %903 = vmatpush1.msra.mxu0 0.0
      %904 = vmatprep.subr.mxu0 0.0
      %905 = vmatpush1.msra.mxu0 0.0
      %906 = vmatprep.subr.mxu0 0.0
      %907 = vmatpush1.msra.mxu0 0.0
      %908 = vmatprep.subr.mxu0 0.0
      %909 = vmatpush1.msra.mxu0 0.0
      %910 = vmatprep.subr.mxu0 0.0
      %911 = vmatpush1.msra.mxu0 0.0
      %912 = vmatprep.subr.mxu0 0.0
      %913 = vmatpush1.msra.mxu0 0.0
      %914 = vmatprep.subr.mxu0 0.0
      %915 = vmatpush1.msra.mxu0 0.0
      %916 = vmatprep.subr.mxu0 0.0
      %917 = vmatpush1.msra.mxu0 0.0
      %918 = vmatprep.subr.mxu0 0.0
      %919 = vmatpush1.msra.mxu0 0.0
      %920 = vmatprep.subr.mxu0 0.0
      %921 = vmatpush1.msra.mxu0 0.0
      %922 = vmatprep.subr.mxu0 0.0
      %923 = vmatpush1.msra.mxu0 0.0
      %924 = vmatprep.subr.mxu0 0.0
      %925 = vmatpush1.msra.mxu0 0.0
      %926 = vmatprep.subr.mxu0 0.0
      %927 = vmatpush1.msra.mxu0 0.0
      %928 = vmatprep.subr.mxu0 0.0
      %929 = vmatpush1.msra.mxu0 0.0
      %930 = vmatprep.subr.mxu0 0.0
      %931 = vmatpush1.msra.mxu0 0.0
      %932 = vmatprep.subr.mxu0 0.0
      %933 = vmatpush1.msra.mxu0 0.0
      %934 = vmatprep.subr.mxu0 0.0
      %935 = vmatpush1.msra.mxu0 0.0
      %936 = vmatprep.subr.mxu0 0.0
      %937 = vmatpush1.msra.mxu0 0.0
      %938 = vmatprep.subr.mxu0 0.0
      %939 = vmatpush1.msra.mxu0 0.0
      %940 = vmatprep.subr.mxu0 0.0
      %941 = vmatpush1.msra.mxu0 0.0
      %942 = vmatprep.subr.mxu0 0.0
      %943 = vmatpush1.msra.mxu0 0.0
      %944 = vmatprep.subr.mxu0 0.0
      %945 = vmatpush1.msra.mxu0 0.0
      %946 = vmatprep.subr.mxu0 0.0
      %947 = vmatpush1.msra.mxu0 0.0
      %948 = vmatprep.mubr.f32.mxu0 0.0
      %949 = vmatmul.mubr.f32.gmra.mrb[0].mxu0 %v879
      %v950 = vpop.f32.mrb[0].mxu0
      %v951 = vadd.f32 %v864, %v950
      %v952 = vpop.f32.mrb[0].mxu0
      %953 = vmatprep.mubr.f32.mxu0 0.0
      %954 = vmatmul.mubr.f32.gmra.mrb[0].mxu0 %v882
      %v955 = vpop.f32.mrb[0].mxu0
      %v956 = vadd.f32 %v869, %v955
      %v957 = vpop.f32.mrb[0].mxu0
      %958 = vdwg.mxu0
      %v959 = vadd.f32 %v158, %v611
      %v960 = vadd.f32 %v159, %v616
      %v961 = vadd.f32 %v160, %v951
      %v962 = vadd.f32 %v161, %v956
      %s963 = scalar_lea.vmem %s1, 32
      %v964 = vld [vmem:[%s963] sm:$0xff]
      %v965 = vld [vmem:[%s963 + $0x8] sm:$0xff]
      %v966 = vld [vmem:[%s963 + $0x10] sm:$0xff]
      %v967 = vld [vmem:[%s963 + $0x18] sm:$0xff]
      %v969 = vsel %vm166, %v959, 0
      %v972 = vsel %vm166, %v960, 0
      %v975 = vsel %vm166, %v961, 0
      %v978 = vsel %vm166, %v962, 0
      %980 = vmatprep.subr.mxu0 0.0
      %981 = vmatpush1.msra.mxu0 %v964
      %982 = vmatprep.subr.mxu0 0.0
      %983 = vmatpush1.msra.mxu0 %v965
      %984 = vmatprep.subr.mxu0 0.0
      %985 = vmatpush1.msra.mxu0 %v966
      %986 = vmatprep.subr.mxu0 0.0
      %987 = vmatpush1.msra.mxu0 %v967
      %988 = vmatprep.subr.mxu0 0.0
      %989 = vmatpush1.msra.mxu0 0.0
      %990 = vmatprep.subr.mxu0 0.0
      %991 = vmatpush1.msra.mxu0 0.0
      %992 = vmatprep.subr.mxu0 0.0
      %993 = vmatpush1.msra.mxu0 0.0
      %994 = vmatprep.subr.mxu0 0.0
      %995 = vmatpush1.msra.mxu0 0.0
      %996 = vmatprep.subr.mxu0 0.0
      %997 = vmatpush1.msra.mxu0 0.0
      %998 = vmatprep.subr.mxu0 0.0
      %999 = vmatpush1.msra.mxu0 0.0
      %1000 = vmatprep.subr.mxu0 0.0
      %1001 = vmatpush1.msra.mxu0 0.0
      %1002 = vmatprep.subr.mxu0 0.0
      %1003 = vmatpush1.msra.mxu0 0.0
      %1004 = vmatprep.subr.mxu0 0.0
      %1005 = vmatpush1.msra.mxu0 0.0
      %1006 = vmatprep.subr.mxu0 0.0
      %1007 = vmatpush1.msra.mxu0 0.0
      %1008 = vmatprep.subr.mxu0 0.0
      %1009 = vmatpush1.msra.mxu0 0.0
      %1010 = vmatprep.subr.mxu0 0.0
      %1011 = vmatpush1.msra.mxu0 0.0
      %1012 = vmatprep.subr.mxu0 0.0
      %1013 = vmatpush1.msra.mxu0 0.0
      %1014 = vmatprep.subr.mxu0 0.0
      %1015 = vmatpush1.msra.mxu0 0.0
      %1016 = vmatprep.subr.mxu0 0.0
      %1017 = vmatpush1.msra.mxu0 0.0
      %1018 = vmatprep.subr.mxu0 0.0
      %1019 = vmatpush1.msra.mxu0 0.0
      %1020 = vmatprep.subr.mxu0 0.0
      %1021 = vmatpush1.msra.mxu0 0.0
      %1022 = vmatprep.subr.mxu0 0.0
      %1023 = vmatpush1.msra.mxu0 0.0
      %1024 = vmatprep.subr.mxu0 0.0
      %1025 = vmatpush1.msra.mxu0 0.0
      %1026 = vmatprep.subr.mxu0 0.0
      %1027 = vmatpush1.msra.mxu0 0.0
      %1028 = vmatprep.subr.mxu0 0.0
      %1029 = vmatpush1.msra.mxu0 0.0
      %1030 = vmatprep.subr.mxu0 0.0
      %1031 = vmatpush1.msra.mxu0 0.0
      %1032 = vmatprep.subr.mxu0 0.0
      %1033 = vmatpush1.msra.mxu0 0.0
      %1034 = vmatprep.subr.mxu0 0.0
      %1035 = vmatpush1.msra.mxu0 0.0
      %1036 = vmatprep.subr.mxu0 0.0
      %1037 = vmatpush1.msra.mxu0 0.0
      %1038 = vmatprep.subr.mxu0 0.0
      %1039 = vmatpush1.msra.mxu0 0.0
      %1040 = vmatprep.subr.mxu0 0.0
      %1041 = vmatpush1.msra.mxu0 0.0
      %1042 = vmatprep.subr.mxu0 0.0
      %1043 = vmatpush1.msra.mxu0 0.0
      %1044 = vmatprep.mubr.f32.mxu0 0.0
      %1045 = vmatmul.mubr.f32.gmra.mrb[0].mxu0 %v969
      %v1046 = vpop.f32.mrb[0].mxu0
      %v1047 = vadd.f32 0.0, %v1046
      %v1048 = vpop.f32.mrb[0].mxu0
      %1049 = vmatprep.mubr.f32.mxu0 0.0
      %1050 = vmatmul.mubr.f32.gmra.mrb[0].mxu0 %v972
      %v1051 = vpop.f32.mrb[0].mxu0
      %v1052 = vadd.f32 0.0, %v1051
      %v1053 = vpop.f32.mrb[0].mxu0
      %1054 = vmatprep.mubr.f32.mxu0 0.0
      %1055 = vmatmul.mubr.f32.gmra.mrb[0].mxu0 %v975
      %v1056 = vpop.f32.mrb[0].mxu0
      %v1057 = vadd.f32 0.0, %v1056
      %v1058 = vpop.f32.mrb[0].mxu0
      %1059 = vmatprep.mubr.f32.mxu0 0.0
      %1060 = vmatmul.mubr.f32.gmra.mrb[0].mxu0 %v978
      %v1061 = vpop.f32.mrb[0].mxu0
      %v1062 = vadd.f32 0.0, %v1061
      %v1063 = vpop.f32.mrb[0].mxu0
      %1064 = vdwg.mxu0
      %v1065 = vmul.f32 %v1047, %v267
      %v1066 = vmul.f32 %v1052, %v272
      %v1067 = vmul.f32 %v1057, %v267
      %v1068 = vmul.f32 %v1062, %v272
      %v1070 = vsel %vm166, %v1047, 0
      %v1073 = vsel %vm166, %v1052, 0
      %1075 = vmatprep.subr.mxu0 0.0
      %1076 = vmatpush1.xpose.msra.mxu0 %v969
      %1077 = vmatprep.subr.mxu0 0.0
      %1078 = vmatpush1.xpose.msra.mxu0 %v972
      %1079 = vmatprep.subr.mxu0 0.0
      %1080 = vmatpush1.xpose.msra.mxu0 0.0
      %1081 = vmatprep.subr.mxu0 0.0
      %1082 = vmatpush1.xpose.msra.mxu0 0.0
      %1083 = vmatprep.subr.mxu0 0.0
      %1084 = vmatpush1.xpose.msra.mxu0 0.0
      %1085 = vmatprep.subr.mxu0 0.0
      %1086 = vmatpush1.xpose.msra.mxu0 0.0
      %1087 = vmatprep.subr.mxu0 0.0
      %1088 = vmatpush1.xpose.msra.mxu0 0.0
      %1089 = vmatprep.subr.mxu0 0.0
      %1090 = vmatpush1.xpose.msra.mxu0 0.0
      %1091 = vmatprep.subr.mxu0 0.0
      %1092 = vmatpush1.xpose.msra.mxu0 0.0
      %1093 = vmatprep.subr.mxu0 0.0
      %1094 = vmatpush1.xpose.msra.mxu0 0.0
      %1095 = vmatprep.subr.mxu0 0.0
      %1096 = vmatpush1.xpose.msra.mxu0 0.0
      %1097 = vmatprep.subr.mxu0 0.0
      %1098 = vmatpush1.xpose.msra.mxu0 0.0
      %1099 = vmatprep.subr.mxu0 0.0
      %1100 = vmatpush1.xpose.msra.mxu0 0.0
      %1101 = vmatprep.subr.mxu0 0.0
      %1102 = vmatpush1.xpose.msra.mxu0 0.0
      %1103 = vmatprep.subr.mxu0 0.0
      %1104 = vmatpush1.xpose.msra.mxu0 0.0
      %1105 = vmatprep.subr.mxu0 0.0
      %1106 = vmatpush1.xpose.msra.mxu0 0.0
      %1107 = vmatprep.subr.mxu0 0.0
      %1108 = vmatpush1.xpose.msra.mxu0 0.0
      %1109 = vmatprep.subr.mxu0 0.0
      %1110 = vmatpush1.xpose.msra.mxu0 0.0
      %1111 = vmatprep.subr.mxu0 0.0
      %1112 = vmatpush1.xpose.msra.mxu0 0.0
      %1113 = vmatprep.subr.mxu0 0.0
      %1114 = vmatpush1.xpose.msra.mxu0 0.0
      %1115 = vmatprep.subr.mxu0 0.0
      %1116 = vmatpush1.xpose.msra.mxu0 0.0
      %1117 = vmatprep.subr.mxu0 0.0
      %1118 = vmatpush1.xpose.msra.mxu0 0.0
      %1119 = vmatprep.subr.mxu0 0.0
      %1120 = vmatpush1.xpose.msra.mxu0 0.0
      %1121 = vmatprep.subr.mxu0 0.0
      %1122 = vmatpush1.xpose.msra.mxu0 0.0
      %1123 = vmatprep.subr.mxu0 0.0
      %1124 = vmatpush1.xpose.msra.mxu0 0.0
      %1125 = vmatprep.subr.mxu0 0.0
      %1126 = vmatpush1.xpose.msra.mxu0 0.0
      %1127 = vmatprep.subr.mxu0 0.0
      %1128 = vmatpush1.xpose.msra.mxu0 0.0
      %1129 = vmatprep.subr.mxu0 0.0
      %1130 = vmatpush1.xpose.msra.mxu0 0.0
      %1131 = vmatprep.subr.mxu0 0.0
      %1132 = vmatpush1.xpose.msra.mxu0 0.0
      %1133 = vmatprep.subr.mxu0 0.0
      %1134 = vmatpush1.xpose.msra.mxu0 0.0
      %1135 = vmatprep.subr.mxu0 0.0
      %1136 = vmatpush1.xpose.msra.mxu0 0.0
      %1137 = vmatprep.subr.mxu0 0.0
      %1138 = vmatpush1.xpose.msra.mxu0 0.0
      %1139 = vmatprep.mubr.f32.mxu0 0.0
      %1140 = vmatmul.mubr.f32.gmra.mrb[0].mxu0 %v1070
      %v1141 = vpop.f32.mrb[0].mxu0
      %v1142 = vadd.f32 0.0, %v1141
      %v1143 = vpop.f32.mrb[0].mxu0
      %1144 = vmatprep.mubr.f32.mxu0 0.0
      %1145 = vmatmul.mubr.f32.gmra.mrb[0].mxu0 %v1073
      %v1146 = vpop.f32.mrb[0].mxu0
      %v1147 = vadd.f32 0.0, %v1146
      %v1148 = vpop.f32.mrb[0].mxu0
      %1149 = vdwg.mxu0
      %1150 = vrot.lane.b32.xlu0 %v1047, 96
      %v1151 = vpop.permute.xlu0 %1150
      %1152 = vrot.lane.b32.xlu0 %v1052, 96
      %v1153 = vpop.permute.xlu0 %1152
      %v1154 = vsel %vm166, %v1151, 0
      %v1156 = vsel %vm166, %v1153, 0
      %1158 = vmatprep.subr.mxu0 0.0
      %1159 = vmatpush1.xpose.msra.mxu0 %v969
      %1160 = vmatprep.subr.mxu0 0.0
      %1161 = vmatpush1.xpose.msra.mxu0 %v972
      %1162 = vmatprep.subr.mxu0 0.0
      %1163 = vmatpush1.xpose.msra.mxu0 0.0
      %1164 = vmatprep.subr.mxu0 0.0
      %1165 = vmatpush1.xpose.msra.mxu0 0.0
      %1166 = vmatprep.subr.mxu0 0.0
      %1167 = vmatpush1.xpose.msra.mxu0 0.0
      %1168 = vmatprep.subr.mxu0 0.0
      %1169 = vmatpush1.xpose.msra.mxu0 0.0
      %1170 = vmatprep.subr.mxu0 0.0
      %1171 = vmatpush1.xpose.msra.mxu0 0.0
      %1172 = vmatprep.subr.mxu0 0.0
      %1173 = vmatpush1.xpose.msra.mxu0 0.0
      %1174 = vmatprep.subr.mxu0 0.0
      %1175 = vmatpush1.xpose.msra.mxu0 0.0
      %1176 = vmatprep.subr.mxu0 0.0
      %1177 = vmatpush1.xpose.msra.mxu0 0.0
      %1178 = vmatprep.subr.mxu0 0.0
      %1179 = vmatpush1.xpose.msra.mxu0 0.0
      %1180 = vmatprep.subr.mxu0 0.0
      %1181 = vmatpush1.xpose.msra.mxu0 0.0
      %1182 = vmatprep.subr.mxu0 0.0
      %1183 = vmatpush1.xpose.msra.mxu0 0.0
      %1184 = vmatprep.subr.mxu0 0.0
      %1185 = vmatpush1.xpose.msra.mxu0 0.0
      %1186 = vmatprep.subr.mxu0 0.0
      %1187 = vmatpush1.xpose.msra.mxu0 0.0
      %1188 = vmatprep.subr.mxu0 0.0
      %1189 = vmatpush1.xpose.msra.mxu0 0.0
      %1190 = vmatprep.subr.mxu0 0.0
      %1191 = vmatpush1.xpose.msra.mxu0 0.0
      %1192 = vmatprep.subr.mxu0 0.0
      %1193 = vmatpush1.xpose.msra.mxu0 0.0
      %1194 = vmatprep.subr.mxu0 0.0
      %1195 = vmatpush1.xpose.msra.mxu0 0.0
      %1196 = vmatprep.subr.mxu0 0.0
      %1197 = vmatpush1.xpose.msra.mxu0 0.0
      %1198 = vmatprep.subr.mxu0 0.0
      %1199 = vmatpush1.xpose.msra.mxu0 0.0
      %1200 = vmatprep.subr.mxu0 0.0
      %1201 = vmatpush1.xpose.msra.mxu0 0.0
      %1202 = vmatprep.subr.mxu0 0.0
      %1203 = vmatpush1.xpose.msra.mxu0 0.0
      %1204 = vmatprep.subr.mxu0 0.0
      %1205 = vmatpush1.xpose.msra.mxu0 0.0
      %1206 = vmatprep.subr.mxu0 0.0
      %1207 = vmatpush1.xpose.msra.mxu0 0.0
      %1208 = vmatprep.subr.mxu0 0.0
      %1209 = vmatpush1.xpose.msra.mxu0 0.0
      %1210 = vmatprep.subr.mxu0 0.0
      %1211 = vmatpush1.xpose.msra.mxu0 0.0
      %1212 = vmatprep.subr.mxu0 0.0
      %1213 = vmatpush1.xpose.msra.mxu0 0.0
      %1214 = vmatprep.subr.mxu0 0.0
      %1215 = vmatpush1.xpose.msra.mxu0 0.0
      %1216 = vmatprep.subr.mxu0 0.0
      %1217 = vmatpush1.xpose.msra.mxu0 0.0
      %1218 = vmatprep.subr.mxu0 0.0
      %1219 = vmatpush1.xpose.msra.mxu0 0.0
      %1220 = vmatprep.subr.mxu0 0.0
      %1221 = vmatpush1.xpose.msra.mxu0 0.0
      %1222 = vmatprep.mubr.f32.mxu0 0.0
      %1223 = vmatmul.mubr.f32.gmra.mrb[0].mxu0 %v1154
      %v1224 = vpop.f32.mrb[0].mxu0
      %v1225 = vadd.f32 0.0, %v1224
      %v1226 = vpop.f32.mrb[0].mxu0
      %1227 = vmatprep.mubr.f32.mxu0 0.0
      %1228 = vmatmul.mubr.f32.gmra.mrb[0].mxu0 %v1156
      %v1229 = vpop.f32.mrb[0].mxu0
      %v1230 = vadd.f32 0.0, %v1229
      %v1231 = vpop.f32.mrb[0].mxu0
      %1232 = vdwg.mxu0
      %1235 = vrot.lane.b32.xlu0 %v1065, 32
      %v1236 = vpop.permute.xlu0 %1235
      %1237 = vrot.lane.b32.xlu0 %v1066, 32
      %v1238 = vpop.permute.xlu0 %1237
      %v1242 = vsel %vm450, %v1225, 0
      %v1245 = vsel %vm450, %v1230, 0
      %1247 = vmatprep.subr.mxu0 0.0
      %1248 = vmatpush1.msra.mxu0 %v1236
      %1249 = vmatprep.subr.mxu0 0.0
      %1250 = vmatpush1.msra.mxu0 %v1238
      %1251 = vmatprep.subr.mxu0 0.0
      %1252 = vmatpush1.msra.mxu0 0.0
      %1253 = vmatprep.subr.mxu0 0.0
      %1254 = vmatpush1.msra.mxu0 0.0
      %1255 = vmatprep.subr.mxu0 0.0
      %1256 = vmatpush1.msra.mxu0 0.0
      %1257 = vmatprep.subr.mxu0 0.0
      %1258 = vmatpush1.msra.mxu0 0.0
      %1259 = vmatprep.subr.mxu0 0.0
      %1260 = vmatpush1.msra.mxu0 0.0
      %1261 = vmatprep.subr.mxu0 0.0
      %1262 = vmatpush1.msra.mxu0 0.0
      %1263 = vmatprep.subr.mxu0 0.0
      %1264 = vmatpush1.msra.mxu0 0.0
      %1265 = vmatprep.subr.mxu0 0.0
      %1266 = vmatpush1.msra.mxu0 0.0
      %1267 = vmatprep.subr.mxu0 0.0
      %1268 = vmatpush1.msra.mxu0 0.0
      %1269 = vmatprep.subr.mxu0 0.0
      %1270 = vmatpush1.msra.mxu0 0.0
      %1271 = vmatprep.subr.mxu0 0.0
      %1272 = vmatpush1.msra.mxu0 0.0
      %1273 = vmatprep.subr.mxu0 0.0
      %1274 = vmatpush1.msra.mxu0 0.0
      %1275 = vmatprep.subr.mxu0 0.0
      %1276 = vmatpush1.msra.mxu0 0.0
      %1277 = vmatprep.subr.mxu0 0.0
      %1278 = vmatpush1.msra.mxu0 0.0
      %1279 = vmatprep.subr.mxu0 0.0
      %1280 = vmatpush1.msra.mxu0 0.0
      %1281 = vmatprep.subr.mxu0 0.0
      %1282 = vmatpush1.msra.mxu0 0.0
      %1283 = vmatprep.subr.mxu0 0.0
      %1284 = vmatpush1.msra.mxu0 0.0
      %1285 = vmatprep.subr.mxu0 0.0
      %1286 = vmatpush1.msra.mxu0 0.0
      %1287 = vmatprep.subr.mxu0 0.0
      %1288 = vmatpush1.msra.mxu0 0.0
      %1289 = vmatprep.subr.mxu0 0.0
      %1290 = vmatpush1.msra.mxu0 0.0
      %1291 = vmatprep.subr.mxu0 0.0
      %1292 = vmatpush1.msra.mxu0 0.0
      %1293 = vmatprep.subr.mxu0 0.0
      %1294 = vmatpush1.msra.mxu0 0.0
      %1295 = vmatprep.subr.mxu0 0.0
      %1296 = vmatpush1.msra.mxu0 0.0
      %1297 = vmatprep.subr.mxu0 0.0
      %1298 = vmatpush1.msra.mxu0 0.0
      %1299 = vmatprep.subr.mxu0 0.0
      %1300 = vmatpush1.msra.mxu0 0.0
      %1301 = vmatprep.subr.mxu0 0.0
      %1302 = vmatpush1.msra.mxu0 0.0
      %1303 = vmatprep.subr.mxu0 0.0
      %1304 = vmatpush1.msra.mxu0 0.0
      %1305 = vmatprep.subr.mxu0 0.0
      %1306 = vmatpush1.msra.mxu0 0.0
      %1307 = vmatprep.subr.mxu0 0.0
      %1308 = vmatpush1.msra.mxu0 0.0
      %1309 = vmatprep.subr.mxu0 0.0
      %1310 = vmatpush1.msra.mxu0 0.0
      %1311 = vmatprep.mubr.f32.mxu0 0.0
      %1312 = vmatmul.mubr.f32.gmra.mrb[0].mxu0 %v1242
      %v1313 = vpop.f32.mrb[0].mxu0
      %v1314 = vadd.f32 0.0, %v1313
      %v1315 = vpop.f32.mrb[0].mxu0
      %1316 = vmatprep.mubr.f32.mxu0 0.0
      %1317 = vmatmul.mubr.f32.gmra.mrb[0].mxu0 %v1245
      %v1318 = vpop.f32.mrb[0].mxu0
      %v1319 = vadd.f32 0.0, %v1318
      %v1320 = vpop.f32.mrb[0].mxu0
      %1321 = vdwg.mxu0
      %1322 = vrot.lane.b32.xlu0 %v1065, 64
      %v1323 = vpop.permute.xlu0 %1322
      %1324 = vrot.lane.b32.xlu0 %v1066, 64
      %v1325 = vpop.permute.xlu0 %1324
      %v1329 = vsel %vm450, %v1142, 0
      %v1332 = vsel %vm450, %v1147, 0
      %1334 = vmatprep.subr.mxu0 0.0
      %1335 = vmatpush1.msra.mxu0 %v1323
      %1336 = vmatprep.subr.mxu0 0.0
      %1337 = vmatpush1.msra.mxu0 %v1325
      %1338 = vmatprep.subr.mxu0 0.0
      %1339 = vmatpush1.msra.mxu0 0.0
      %1340 = vmatprep.subr.mxu0 0.0
      %1341 = vmatpush1.msra.mxu0 0.0
      %1342 = vmatprep.subr.mxu0 0.0
      %1343 = vmatpush1.msra.mxu0 0.0
      %1344 = vmatprep.subr.mxu0 0.0
      %1345 = vmatpush1.msra.mxu0 0.0
      %1346 = vmatprep.subr.mxu0 0.0
      %1347 = vmatpush1.msra.mxu0 0.0
      %1348 = vmatprep.subr.mxu0 0.0
      %1349 = vmatpush1.msra.mxu0 0.0
      %1350 = vmatprep.subr.mxu0 0.0
      %1351 = vmatpush1.msra.mxu0 0.0
      %1352 = vmatprep.subr.mxu0 0.0
      %1353 = vmatpush1.msra.mxu0 0.0
      %1354 = vmatprep.subr.mxu0 0.0
      %1355 = vmatpush1.msra.mxu0 0.0
      %1356 = vmatprep.subr.mxu0 0.0
      %1357 = vmatpush1.msra.mxu0 0.0
      %1358 = vmatprep.subr.mxu0 0.0
      %1359 = vmatpush1.msra.mxu0 0.0
      %1360 = vmatprep.subr.mxu0 0.0
      %1361 = vmatpush1.msra.mxu0 0.0
      %1362 = vmatprep.subr.mxu0 0.0
      %1363 = vmatpush1.msra.mxu0 0.0
      %1364 = vmatprep.subr.mxu0 0.0
      %1365 = vmatpush1.msra.mxu0 0.0
      %1366 = vmatprep.subr.mxu0 0.0
      %1367 = vmatpush1.msra.mxu0 0.0
      %1368 = vmatprep.subr.mxu0 0.0
      %1369 = vmatpush1.msra.mxu0 0.0
      %1370 = vmatprep.subr.mxu0 0.0
      %1371 = vmatpush1.msra.mxu0 0.0
      %1372 = vmatprep.subr.mxu0 0.0
      %1373 = vmatpush1.msra.mxu0 0.0
      %1374 = vmatprep.subr.mxu0 0.0
      %1375 = vmatpush1.msra.mxu0 0.0
      %1376 = vmatprep.subr.mxu0 0.0
      %1377 = vmatpush1.msra.mxu0 0.0
      %1378 = vmatprep.subr.mxu0 0.0
      %1379 = vmatpush1.msra.mxu0 0.0
      %1380 = vmatprep.subr.mxu0 0.0
      %1381 = vmatpush1.msra.mxu0 0.0
      %1382 = vmatprep.subr.mxu0 0.0
      %1383 = vmatpush1.msra.mxu0 0.0
      %1384 = vmatprep.subr.mxu0 0.0
      %1385 = vmatpush1.msra.mxu0 0.0
      %1386 = vmatprep.subr.mxu0 0.0
      %1387 = vmatpush1.msra.mxu0 0.0
      %1388 = vmatprep.subr.mxu0 0.0
      %1389 = vmatpush1.msra.mxu0 0.0
      %1390 = vmatprep.subr.mxu0 0.0
      %1391 = vmatpush1.msra.mxu0 0.0
      %1392 = vmatprep.subr.mxu0 0.0
      %1393 = vmatpush1.msra.mxu0 0.0
      %1394 = vmatprep.subr.mxu0 0.0
      %1395 = vmatpush1.msra.mxu0 0.0
      %1396 = vmatprep.subr.mxu0 0.0
      %1397 = vmatpush1.msra.mxu0 0.0
      %1398 = vmatprep.mubr.f32.mxu0 0.0
      %1399 = vmatmul.mubr.f32.gmra.mrb[0].mxu0 %v1329
      %v1400 = vpop.f32.mrb[0].mxu0
      %v1401 = vadd.f32 %v1314, %v1400
      %v1402 = vpop.f32.mrb[0].mxu0
      %1403 = vmatprep.mubr.f32.mxu0 0.0
      %1404 = vmatmul.mubr.f32.gmra.mrb[0].mxu0 %v1332
      %v1405 = vpop.f32.mrb[0].mxu0
      %v1406 = vadd.f32 %v1319, %v1405
      %v1407 = vpop.f32.mrb[0].mxu0
      %1408 = vdwg.mxu0
      %v1410 = vsel %vm166, %v1057, 0
      %v1413 = vsel %vm166, %v1062, 0
      %1415 = vmatprep.subr.mxu0 0.0
      %1416 = vmatpush1.xpose.msra.mxu0 %v975
      %1417 = vmatprep.subr.mxu0 0.0
      %1418 = vmatpush1.xpose.msra.mxu0 %v978
      %1419 = vmatprep.subr.mxu0 0.0
      %1420 = vmatpush1.xpose.msra.mxu0 0.0
      %1421 = vmatprep.subr.mxu0 0.0
      %1422 = vmatpush1.xpose.msra.mxu0 0.0
      %1423 = vmatprep.subr.mxu0 0.0
      %1424 = vmatpush1.xpose.msra.mxu0 0.0
      %1425 = vmatprep.subr.mxu0 0.0
      %1426 = vmatpush1.xpose.msra.mxu0 0.0
      %1427 = vmatprep.subr.mxu0 0.0
      %1428 = vmatpush1.xpose.msra.mxu0 0.0
      %1429 = vmatprep.subr.mxu0 0.0
      %1430 = vmatpush1.xpose.msra.mxu0 0.0
      %1431 = vmatprep.subr.mxu0 0.0
      %1432 = vmatpush1.xpose.msra.mxu0 0.0
      %1433 = vmatprep.subr.mxu0 0.0
      %1434 = vmatpush1.xpose.msra.mxu0 0.0
      %1435 = vmatprep.subr.mxu0 0.0
      %1436 = vmatpush1.xpose.msra.mxu0 0.0
      %1437 = vmatprep.subr.mxu0 0.0
      %1438 = vmatpush1.xpose.msra.mxu0 0.0
      %1439 = vmatprep.subr.mxu0 0.0
      %1440 = vmatpush1.xpose.msra.mxu0 0.0
      %1441 = vmatprep.subr.mxu0 0.0
      %1442 = vmatpush1.xpose.msra.mxu0 0.0
      %1443 = vmatprep.subr.mxu0 0.0
      %1444 = vmatpush1.xpose.msra.mxu0 0.0
      %1445 = vmatprep.subr.mxu0 0.0
      %1446 = vmatpush1.xpose.msra.mxu0 0.0
      %1447 = vmatprep.subr.mxu0 0.0
      %1448 = vmatpush1.xpose.msra.mxu0 0.0
      %1449 = vmatprep.subr.mxu0 0.0
      %1450 = vmatpush1.xpose.msra.mxu0 0.0
      %1451 = vmatprep.subr.mxu0 0.0
      %1452 = vmatpush1.xpose.msra.mxu0 0.0
      %1453 = vmatprep.subr.mxu0 0.0
      %1454 = vmatpush1.xpose.msra.mxu0 0.0
      %1455 = vmatprep.subr.mxu0 0.0
      %1456 = vmatpush1.xpose.msra.mxu0 0.0
      %1457 = vmatprep.subr.mxu0 0.0
      %1458 = vmatpush1.xpose.msra.mxu0 0.0
      %1459 = vmatprep.subr.mxu0 0.0
      %1460 = vmatpush1.xpose.msra.mxu0 0.0
      %1461 = vmatprep.subr.mxu0 0.0
      %1462 = vmatpush1.xpose.msra.mxu0 0.0
      %1463 = vmatprep.subr.mxu0 0.0
      %1464 = vmatpush1.xpose.msra.mxu0 0.0
      %1465 = vmatprep.subr.mxu0 0.0
      %1466 = vmatpush1.xpose.msra.mxu0 0.0
      %1467 = vmatprep.subr.mxu0 0.0
      %1468 = vmatpush1.xpose.msra.mxu0 0.0
      %1469 = vmatprep.subr.mxu0 0.0
      %1470 = vmatpush1.xpose.msra.mxu0 0.0
      %1471 = vmatprep.subr.mxu0 0.0
      %1472 = vmatpush1.xpose.msra.mxu0 0.0
      %1473 = vmatprep.subr.mxu0 0.0
      %1474 = vmatpush1.xpose.msra.mxu0 0.0
      %1475 = vmatprep.subr.mxu0 0.0
      %1476 = vmatpush1.xpose.msra.mxu0 0.0
      %1477 = vmatprep.subr.mxu0 0.0
      %1478 = vmatpush1.xpose.msra.mxu0 0.0
      %1479 = vmatprep.mubr.f32.mxu0 0.0
      %1480 = vmatmul.mubr.f32.gmra.mrb[0].mxu0 %v1410
      %v1481 = vpop.f32.mrb[0].mxu0
      %v1482 = vadd.f32 0.0, %v1481
      %v1483 = vpop.f32.mrb[0].mxu0
      %1484 = vmatprep.mubr.f32.mxu0 0.0
      %1485 = vmatmul.mubr.f32.gmra.mrb[0].mxu0 %v1413
      %v1486 = vpop.f32.mrb[0].mxu0
      %v1487 = vadd.f32 0.0, %v1486
      %v1488 = vpop.f32.mrb[0].mxu0
      %1489 = vdwg.mxu0
      %1490 = vrot.lane.b32.xlu0 %v1057, 96
      %v1491 = vpop.permute.xlu0 %1490
      %1492 = vrot.lane.b32.xlu0 %v1062, 96
      %v1493 = vpop.permute.xlu0 %1492
      %v1494 = vsel %vm166, %v1491, 0
      %v1496 = vsel %vm166, %v1493, 0
      %1498 = vmatprep.subr.mxu0 0.0
      %1499 = vmatpush1.xpose.msra.mxu0 %v975
      %1500 = vmatprep.subr.mxu0 0.0
      %1501 = vmatpush1.xpose.msra.mxu0 %v978
      %1502 = vmatprep.subr.mxu0 0.0
      %1503 = vmatpush1.xpose.msra.mxu0 0.0
      %1504 = vmatprep.subr.mxu0 0.0
      %1505 = vmatpush1.xpose.msra.mxu0 0.0
      %1506 = vmatprep.subr.mxu0 0.0
      %1507 = vmatpush1.xpose.msra.mxu0 0.0
      %1508 = vmatprep.subr.mxu0 0.0
      %1509 = vmatpush1.xpose.msra.mxu0 0.0
      %1510 = vmatprep.subr.mxu0 0.0
      %1511 = vmatpush1.xpose.msra.mxu0 0.0
      %1512 = vmatprep.subr.mxu0 0.0
      %1513 = vmatpush1.xpose.msra.mxu0 0.0
      %1514 = vmatprep.subr.mxu0 0.0
      %1515 = vmatpush1.xpose.msra.mxu0 0.0
      %1516 = vmatprep.subr.mxu0 0.0
      %1517 = vmatpush1.xpose.msra.mxu0 0.0
      %1518 = vmatprep.subr.mxu0 0.0
      %1519 = vmatpush1.xpose.msra.mxu0 0.0
      %1520 = vmatprep.subr.mxu0 0.0
      %1521 = vmatpush1.xpose.msra.mxu0 0.0
      %1522 = vmatprep.subr.mxu0 0.0
      %1523 = vmatpush1.xpose.msra.mxu0 0.0
      %1524 = vmatprep.subr.mxu0 0.0
      %1525 = vmatpush1.xpose.msra.mxu0 0.0
      %1526 = vmatprep.subr.mxu0 0.0
      %1527 = vmatpush1.xpose.msra.mxu0 0.0
      %1528 = vmatprep.subr.mxu0 0.0
      %1529 = vmatpush1.xpose.msra.mxu0 0.0
      %1530 = vmatprep.subr.mxu0 0.0
      %1531 = vmatpush1.xpose.msra.mxu0 0.0
      %1532 = vmatprep.subr.mxu0 0.0
      %1533 = vmatpush1.xpose.msra.mxu0 0.0
      %1534 = vmatprep.subr.mxu0 0.0
      %1535 = vmatpush1.xpose.msra.mxu0 0.0
      %1536 = vmatprep.subr.mxu0 0.0
      %1537 = vmatpush1.xpose.msra.mxu0 0.0
      %1538 = vmatprep.subr.mxu0 0.0
      %1539 = vmatpush1.xpose.msra.mxu0 0.0
      %1540 = vmatprep.subr.mxu0 0.0
      %1541 = vmatpush1.xpose.msra.mxu0 0.0
      %1542 = vmatprep.subr.mxu0 0.0
      %1543 = vmatpush1.xpose.msra.mxu0 0.0
      %1544 = vmatprep.subr.mxu0 0.0
      %1545 = vmatpush1.xpose.msra.mxu0 0.0
      %1546 = vmatprep.subr.mxu0 0.0
      %1547 = vmatpush1.xpose.msra.mxu0 0.0
      %1548 = vmatprep.subr.mxu0 0.0
      %1549 = vmatpush1.xpose.msra.mxu0 0.0
      %1550 = vmatprep.subr.mxu0 0.0
      %1551 = vmatpush1.xpose.msra.mxu0 0.0
      %1552 = vmatprep.subr.mxu0 0.0
      %1553 = vmatpush1.xpose.msra.mxu0 0.0
      %1554 = vmatprep.subr.mxu0 0.0
      %1555 = vmatpush1.xpose.msra.mxu0 0.0
      %1556 = vmatprep.subr.mxu0 0.0
      %1557 = vmatpush1.xpose.msra.mxu0 0.0
      %1558 = vmatprep.subr.mxu0 0.0
      %1559 = vmatpush1.xpose.msra.mxu0 0.0
      %1560 = vmatprep.subr.mxu0 0.0
      %1561 = vmatpush1.xpose.msra.mxu0 0.0
      %1562 = vmatprep.mubr.f32.mxu0 0.0
      %1563 = vmatmul.mubr.f32.gmra.mrb[0].mxu0 %v1494
      %v1564 = vpop.f32.mrb[0].mxu0
      %v1565 = vadd.f32 0.0, %v1564
      %v1566 = vpop.f32.mrb[0].mxu0
      %1567 = vmatprep.mubr.f32.mxu0 0.0
      %1568 = vmatmul.mubr.f32.gmra.mrb[0].mxu0 %v1496
      %v1569 = vpop.f32.mrb[0].mxu0
      %v1570 = vadd.f32 0.0, %v1569
      %v1571 = vpop.f32.mrb[0].mxu0
      %1572 = vdwg.mxu0
      %1575 = vrot.lane.b32.xlu0 %v1067, 32
      %v1576 = vpop.permute.xlu0 %1575
      %1577 = vrot.lane.b32.xlu0 %v1068, 32
      %v1578 = vpop.permute.xlu0 %1577
      %v1582 = vsel %vm450, %v1565, 0
      %v1585 = vsel %vm450, %v1570, 0
      %1587 = vmatprep.subr.mxu0 0.0
      %1588 = vmatpush1.msra.mxu0 %v1576
      %1589 = vmatprep.subr.mxu0 0.0
      %1590 = vmatpush1.msra.mxu0 %v1578
      %1591 = vmatprep.subr.mxu0 0.0
      %1592 = vmatpush1.msra.mxu0 0.0
      %1593 = vmatprep.subr.mxu0 0.0
      %1594 = vmatpush1.msra.mxu0 0.0
      %1595 = vmatprep.subr.mxu0 0.0
      %1596 = vmatpush1.msra.mxu0 0.0
      %1597 = vmatprep.subr.mxu0 0.0
      %1598 = vmatpush1.msra.mxu0 0.0
      %1599 = vmatprep.subr.mxu0 0.0
      %1600 = vmatpush1.msra.mxu0 0.0
      %1601 = vmatprep.subr.mxu0 0.0
      %1602 = vmatpush1.msra.mxu0 0.0
      %1603 = vmatprep.subr.mxu0 0.0
      %1604 = vmatpush1.msra.mxu0 0.0
      %1605 = vmatprep.subr.mxu0 0.0
      %1606 = vmatpush1.msra.mxu0 0.0
      %1607 = vmatprep.subr.mxu0 0.0
      %1608 = vmatpush1.msra.mxu0 0.0
      %1609 = vmatprep.subr.mxu0 0.0
      %1610 = vmatpush1.msra.mxu0 0.0
      %1611 = vmatprep.subr.mxu0 0.0
      %1612 = vmatpush1.msra.mxu0 0.0
      %1613 = vmatprep.subr.mxu0 0.0
      %1614 = vmatpush1.msra.mxu0 0.0
      %1615 = vmatprep.subr.mxu0 0.0
      %1616 = vmatpush1.msra.mxu0 0.0
      %1617 = vmatprep.subr.mxu0 0.0
      %1618 = vmatpush1.msra.mxu0 0.0
      %1619 = vmatprep.subr.mxu0 0.0
      %1620 = vmatpush1.msra.mxu0 0.0
      %1621 = vmatprep.subr.mxu0 0.0
      %1622 = vmatpush1.msra.mxu0 0.0
      %1623 = vmatprep.subr.mxu0 0.0
      %1624 = vmatpush1.msra.mxu0 0.0
      %1625 = vmatprep.subr.mxu0 0.0
      %1626 = vmatpush1.msra.mxu0 0.0
      %1627 = vmatprep.subr.mxu0 0.0
      %1628 = vmatpush1.msra.mxu0 0.0
      %1629 = vmatprep.subr.mxu0 0.0
      %1630 = vmatpush1.msra.mxu0 0.0
      %1631 = vmatprep.subr.mxu0 0.0
      %1632 = vmatpush1.msra.mxu0 0.0
      %1633 = vmatprep.subr.mxu0 0.0
      %1634 = vmatpush1.msra.mxu0 0.0
      %1635 = vmatprep.subr.mxu0 0.0
      %1636 = vmatpush1.msra.mxu0 0.0
      %1637 = vmatprep.subr.mxu0 0.0
      %1638 = vmatpush1.msra.mxu0 0.0
      %1639 = vmatprep.subr.mxu0 0.0
      %1640 = vmatpush1.msra.mxu0 0.0
      %1641 = vmatprep.subr.mxu0 0.0
      %1642 = vmatpush1.msra.mxu0 0.0
      %1643 = vmatprep.subr.mxu0 0.0
      %1644 = vmatpush1.msra.mxu0 0.0
      %1645 = vmatprep.subr.mxu0 0.0
      %1646 = vmatpush1.msra.mxu0 0.0
      %1647 = vmatprep.subr.mxu0 0.0
      %1648 = vmatpush1.msra.mxu0 0.0
      %1649 = vmatprep.subr.mxu0 0.0
      %1650 = vmatpush1.msra.mxu0 0.0
      %1651 = vmatprep.mubr.f32.mxu0 0.0
      %1652 = vmatmul.mubr.f32.gmra.mrb[0].mxu0 %v1582
      %v1653 = vpop.f32.mrb[0].mxu0
      %v1654 = vadd.f32 0.0, %v1653
      %v1655 = vpop.f32.mrb[0].mxu0
      %1656 = vmatprep.mubr.f32.mxu0 0.0
      %1657 = vmatmul.mubr.f32.gmra.mrb[0].mxu0 %v1585
      %v1658 = vpop.f32.mrb[0].mxu0
      %v1659 = vadd.f32 0.0, %v1658
      %v1660 = vpop.f32.mrb[0].mxu0
      %1661 = vdwg.mxu0
      %1662 = vrot.lane.b32.xlu0 %v1067, 64
      %v1663 = vpop.permute.xlu0 %1662
      %1664 = vrot.lane.b32.xlu0 %v1068, 64
      %v1665 = vpop.permute.xlu0 %1664
      %v1669 = vsel %vm450, %v1482, 0
      %v1672 = vsel %vm450, %v1487, 0
      %1674 = vmatprep.subr.mxu0 0.0
      %1675 = vmatpush1.msra.mxu0 %v1663
      %1676 = vmatprep.subr.mxu0 0.0
      %1677 = vmatpush1.msra.mxu0 %v1665
      %1678 = vmatprep.subr.mxu0 0.0
      %1679 = vmatpush1.msra.mxu0 0.0
      %1680 = vmatprep.subr.mxu0 0.0
      %1681 = vmatpush1.msra.mxu0 0.0
      %1682 = vmatprep.subr.mxu0 0.0
      %1683 = vmatpush1.msra.mxu0 0.0
      %1684 = vmatprep.subr.mxu0 0.0
      %1685 = vmatpush1.msra.mxu0 0.0
      %1686 = vmatprep.subr.mxu0 0.0
      %1687 = vmatpush1.msra.mxu0 0.0
      %1688 = vmatprep.subr.mxu0 0.0
      %1689 = vmatpush1.msra.mxu0 0.0
      %1690 = vmatprep.subr.mxu0 0.0
      %1691 = vmatpush1.msra.mxu0 0.0
      %1692 = vmatprep.subr.mxu0 0.0
      %1693 = vmatpush1.msra.mxu0 0.0
      %1694 = vmatprep.subr.mxu0 0.0
      %1695 = vmatpush1.msra.mxu0 0.0
      %1696 = vmatprep.subr.mxu0 0.0
      %1697 = vmatpush1.msra.mxu0 0.0
      %1698 = vmatprep.subr.mxu0 0.0
      %1699 = vmatpush1.msra.mxu0 0.0
      %1700 = vmatprep.subr.mxu0 0.0
      %1701 = vmatpush1.msra.mxu0 0.0
      %1702 = vmatprep.subr.mxu0 0.0
      %1703 = vmatpush1.msra.mxu0 0.0
      %1704 = vmatprep.subr.mxu0 0.0
      %1705 = vmatpush1.msra.mxu0 0.0
      %1706 = vmatprep.subr.mxu0 0.0
      %1707 = vmatpush1.msra.mxu0 0.0
      %1708 = vmatprep.subr.mxu0 0.0
      %1709 = vmatpush1.msra.mxu0 0.0
      %1710 = vmatprep.subr.mxu0 0.0
      %1711 = vmatpush1.msra.mxu0 0.0
      %1712 = vmatprep.subr.mxu0 0.0
      %1713 = vmatpush1.msra.mxu0 0.0
      %1714 = vmatprep.subr.mxu0 0.0
      %1715 = vmatpush1.msra.mxu0 0.0
      %1716 = vmatprep.subr.mxu0 0.0
      %1717 = vmatpush1.msra.mxu0 0.0
      %1718 = vmatprep.subr.mxu0 0.0
      %1719 = vmatpush1.msra.mxu0 0.0
      %1720 = vmatprep.subr.mxu0 0.0
      %1721 = vmatpush1.msra.mxu0 0.0
      %1722 = vmatprep.subr.mxu0 0.0
      %1723 = vmatpush1.msra.mxu0 0.0
      %1724 = vmatprep.subr.mxu0 0.0
      %1725 = vmatpush1.msra.mxu0 0.0
      %1726 = vmatprep.subr.mxu0 0.0
      %1727 = vmatpush1.msra.mxu0 0.0
      %1728 = vmatprep.subr.mxu0 0.0
      %1729 = vmatpush1.msra.mxu0 0.0
      %1730 = vmatprep.subr.mxu0 0.0
      %1731 = vmatpush1.msra.mxu0 0.0
      %1732 = vmatprep.subr.mxu0 0.0
      %1733 = vmatpush1.msra.mxu0 0.0
      %1734 = vmatprep.subr.mxu0 0.0
      %1735 = vmatpush1.msra.mxu0 0.0
      %1736 = vmatprep.subr.mxu0 0.0
      %1737 = vmatpush1.msra.mxu0 0.0
      %1738 = vmatprep.mubr.f32.mxu0 0.0
      %1739 = vmatmul.mubr.f32.gmra.mrb[0].mxu0 %v1669
      %v1740 = vpop.f32.mrb[0].mxu0
      %v1741 = vadd.f32 %v1654, %v1740
      %v1742 = vpop.f32.mrb[0].mxu0
      %1743 = vmatprep.mubr.f32.mxu0 0.0
      %1744 = vmatmul.mubr.f32.gmra.mrb[0].mxu0 %v1672
      %v1745 = vpop.f32.mrb[0].mxu0
      %v1746 = vadd.f32 %v1659, %v1745
      %v1747 = vpop.f32.mrb[0].mxu0
      %1748 = vdwg.mxu0
      %v1749 = vadd.f32 %v959, %v1401
      %v1750 = vadd.f32 %v960, %v1406
      %v1751 = vadd.f32 %v961, %v1741
      %v1752 = vadd.f32 %v962, %v1746
      %1755 = vrot.lane.b32.xlu0 %v1751, 32
      %v1756 = vpop.permute.xlu0 %1755
      %1757 = vrot.lane.b32.xlu0 %v1752, 32
      %v1758 = vpop.permute.xlu0 %1757
      %v1761 = vsel %vm166, %v1749, %v1756
      %v1762 = vsel %vm166, %v1750, %v1758
      %vm1763 = vcmask 523264
      %1764 = vst.msk [vmem:[%s148] sm:$0xff] %vm1763, %v1761
      %1765 = vst.msk [vmem:[%s148 + $0x8] sm:$0xff] %vm1763, %v1762
      %p1766 = scmp.lt.s32.totalorder %s13, 1
      %s1767 = scalar_select %p1766, %s13, 1
      %s1768 = smul.addr %s1767, 2
      %s1769 = smul.addr %s1768, 8
      %s1770 = scalar_lea.vmem %s2, %s1769
      // Predicated region
      $region29: #{transformer_f_w_embed.1} parent=27 // pred_check
        %p1771 = pneg %p78
      $region30: #{transformer_f_w_embed.1} parent=27 // pred_check_branch
        %1773 = sbr.rel (%p1771) target = $region32
      $region31: #{transformer_f_w_embed.1} parent=27 // pred_region
        _
      $region32: #{transformer_f_w_embed.1} parent=27 // pred_fallthru
        _
    $region28: #{transformer_f_w_embed.1} parent=5 // pred_fallthru
      _
    %p1774 = scmp.le.s32.totalorder 2, %s8
    // Predicated region
    $region33: #{transformer_f_w_embed.1} parent=5 // pred_check
      %p1775 = pneg %p1774
    $region34: #{transformer_f_w_embed.1} parent=5 // pred_check_branch
      %1777 = sbr.rel (%p1775) target = $region36
    $region35: #{transformer_f_w_embed.1} parent=5 // pred_region
      %s1778 = ssub.s32 %s8, 2
      // Predicated region
      $region37: #{transformer_f_w_embed.1} parent=35 // pred_check
        %p1779 = pneg %p84
      $region38: #{transformer_f_w_embed.1} parent=35 // pred_check_branch
        %1781 = sbr.rel (%p1779) target = $region40
      $region39: #{transformer_f_w_embed.1} parent=35 // pred_region
        %p1782 = scmp.lt.s32.totalorder %s14, 1
        %s1783 = scalar_select %p1782, %s14, 1
        %s1784 = smul.addr %s1783, 2
        %s1785 = smul.addr %s1784, 8
        %s1786 = scalar_lea.vmem %s2, %s1785
      $region40: #{transformer_f_w_embed.1} parent=35 // pred_fallthru
        _
    $region36: #{transformer_f_w_embed.1} parent=5 // pred_fallthru
      _
  $region6: #{transformer_f_w_embed.1} parent=0 // loop_footer
    %s12 = sadd.s32 1, %s8
  $region7: #{transformer_f_w_embed.1} parent=0 // loop_footer_branch
    %7 = sbr.rel target = $region3
  $region8: #{transformer_f_w_embed.1} parent=0 // loop_exit
    _

</llo_original>
